<compile_context>
chip_gen: v6e
topology: v6e:2x2x1
jax: 0.10.0
libtpu: 0.0.40
codegen_flags: <defaults>
</compile_context>

<pallas_src>
import numpy as np
import jax
import jax.numpy as jnp
from jax.experimental import pallas as pl
from jax.experimental.pallas import tpu as pltpu

LANES = 128  # TPU lane width; every on-chip feature dim is zero-padded to this.


# ------------------------------ Pallas kernel ------------------------------

def net_kernel(xf_ref, t1_ref, bc1_ref, t2_ref, bc2_ref,
               w1_ref, b1_ref, w2_ref, b2_ref, w3_ref, b3_ref,
               o_ref, a1_s, p1_s, a2_s, fc_s):
    """Whole Net forward for the full batch, fully VMEM-resident.

    xf_ref : (N*OH1, 128) bf16   im2col'd input rows (conv1's 3 KH taps folded into K)
    t1_ref : (2, 128, 128) bf16  conv1 K-folded block-Toeplitz tables, one per W-pool phase
    bc1_ref: (1, 128) f32        conv1 bias tiled over pooled-W positions (zero padded)
    t2_ref : (2, 384, 128) bf16  conv2 K-folded tables (K = 3 x 128 pooled-conv1 lanes)
    bc2_ref: (1, 128) f32        conv2 bias tiled (zero padded)
    w1_ref : (768, 128) bf16     fc1 weights with the 6 pooled rows flattened into K
    b1/b2/b3: (1, 128) f32       fc biases (zero padded)
    w2/w3  : (128, 128) bf16     fc2 / fc3 weights (zero padded)
    o_ref  : (N, 128) f32        logits (first 10 lanes valid)
    a1_s   : (N*OH1, 128) f32    conv1 activation (post ReLU, W-pooled)
    p1_s   : (N*PH1, 128) f32    H-pooled conv1 output == conv2 input
    a2_s   : (N*PH1-2, 128) f32  conv2 activation; rows whose 3-row window crosses an
                                 image boundary are junk and are never read back
    fc_s   : (N, 768) f32        flattened pooled conv2 features (fc1 LHS)
    """
    N = o_ref.shape[0]
    MP1 = p1_s.shape[0]                     # N * PH1
    PH1 = MP1 // N
    G2 = a2_s.shape[0]                      # N * PH1 - 2
    KH2 = t2_ref.shape[1] // p1_s.shape[1]  # 3
    PH2 = fc_s.shape[1] // a2_s.shape[1]    # 6

    # ---- conv1 (3x3 valid) + bias + ReLU + max-pool along W ----
    # im2col'd LHS: one lane-dense matmul per W-pool phase; phase-max == W-pool
    # (bias is phase-invariant and ReLU is monotone, so max-first is exact).
    lhs1 = xf_ref[...]                                               # (N*OH1, 128) bf16
    c0 = jnp.dot(lhs1, t1_ref[0], preferred_element_type=jnp.float32)
    c1 = jnp.dot(lhs1, t1_ref[1], preferred_element_type=jnp.float32)
    a1_s[...] = jnp.maximum(jnp.maximum(c0, c1) + bc1_ref[...], 0.0)

    # ---- max-pool along H: OH1 is even, so the global stride-2 pairing never
    # crosses an image boundary even with the batch folded into the rows. ----
    p1_s[...] = jnp.maximum(a1_s[pl.ds(0, MP1, 2), :], a1_s[pl.ds(1, MP1, 2), :])

    # ---- conv2 + bias + ReLU + max-pool along W (K folded via lane concat) ----
    lhs2 = jnp.concatenate([p1_s[pl.ds(kh, G2), :] for kh in range(KH2)],
                           axis=-1).astype(t2_ref.dtype)             # (G2, 384) bf16
    d0 = jnp.dot(lhs2, t2_ref[0], preferred_element_type=jnp.float32)
    d1 = jnp.dot(lhs2, t2_ref[1], preferred_element_type=jnp.float32)
    a2_s[...] = jnp.maximum(jnp.maximum(d0, d1) + bc2_ref[...], 0.0)

    # ---- conv2 max-pool along H + flatten: one 768-lane vector per image ----
    # (floor pooling drops the last conv2 row; junk cross-image rows are skipped
    #  because each image's rows start at n*PH1.)
    for n in range(N):
        base = n * PH1
        rows = [jnp.maximum(a2_s[pl.ds(base + 2 * i, 1), :],
                            a2_s[pl.ds(base + 2 * i + 1, 1), :])
                for i in range(PH2)]
        fc_s[pl.ds(n, 1), :] = jnp.concatenate(rows, axis=-1)        # (1, 768)

    # ---- MLP: fc1 (single K=768 dot) -> relu -> fc2 -> relu -> fc3, M = N ----
    h0 = fc_s[...].astype(w1_ref.dtype)                              # (N, 768) bf16
    h = jnp.dot(h0, w1_ref[...], preferred_element_type=jnp.float32) + b1_ref[...]
    h = jnp.maximum(h, 0.0)
    h = jnp.dot(h.astype(w2_ref.dtype), w2_ref[...],
                preferred_element_type=jnp.float32) + b2_ref[...]
    h = jnp.maximum(h, 0.0)
    o_ref[...] = jnp.dot(h.astype(w3_ref.dtype), w3_ref[...],
                         preferred_element_type=jnp.float32) + b3_ref[...]


# -------------------------------- wrapper ----------------------------------

def _im2col_rows(x_nchw, KH, k_total):
    """(N,Cin,H,W) -> (N*OH, k_total) bf16 rows; lane = kh*(W*Cin) + w*Cin + c."""
    N, Cin, H, W = x_nchw.shape
    OH = H - KH + 1
    xhwc = jnp.transpose(x_nchw, (0, 2, 3, 1)).reshape(N, H, W * Cin)
    xim = jnp.concatenate([xhwc[:, kh:kh + OH, :] for kh in range(KH)], axis=-1)
    pad = k_total - xim.shape[-1]
    if pad:
        xim = jnp.pad(xim, ((0, 0), (0, 0), (0, pad)))
    return xim.reshape(N * OH, k_total).astype(jnp.bfloat16)


@jax.jit
def net_forward_pallas(x_nchw, tables):
    N, Cin, H, W = x_nchw.shape
    KH = 3
    OH1 = H - (KH - 1)          # 30
    PH1 = OH1 // 2              # 15
    G2 = N * PH1 - (KH - 1)     # rows of conv2 activation (incl. junk rows)
    PH2 = (PH1 - (KH - 1)) // 2  # 6

    xf = _im2col_rows(x_nchw, KH, k_total=LANES)      # (N*OH1, 128) bf16

    T1, bc1 = tables["conv1"]
    T2, bc2 = tables["conv2"]
    W1, b1 = tables["fc1"]
    W2, b2 = tables["fc2"]
    W3, b3 = tables["fc3"]

    def const_spec(a):
        zeros = (0,) * a.ndim
        return pl.BlockSpec(a.shape, lambda i, _z=zeros: _z)

    out = pl.pallas_call(
        net_kernel,
        out_shape=jax.ShapeDtypeStruct((N, LANES), jnp.float32),
        grid=(1,),
        in_specs=[
            const_spec(xf),
            const_spec(T1), const_spec(bc1),
            const_spec(T2), const_spec(bc2),
            const_spec(W1), const_spec(b1),
            const_spec(W2), const_spec(b2),
            const_spec(W3), const_spec(b3),
        ],
        out_specs=pl.BlockSpec((N, LANES), lambda i: (0, 0)),
        scratch_shapes=[
            pltpu.VMEM((N * OH1, LANES), jnp.float32),
            pltpu.VMEM((N * PH1, LANES), jnp.float32),
            pltpu.VMEM((G2, LANES), jnp.float32),
            pltpu.VMEM((N, PH2 * LANES), jnp.float32),
        ],
        compiler_params=pltpu.CompilerParams(dimension_semantics=("arbitrary",)),
    )(xf, T1, bc1, T2, bc2, W1, b1, W2, b2, W3, b3)
    return out[:, :10]


# ---------------------- glue: parameter table builders ----------------------

def build_conv_tables(w, b, W_in, blk_k, k_total, pad_out):
    """K-folded block-Toeplitz conv tables (per W-pool phase) + tiled bias.

    Returns T (2, k_total, pad_out) bf16 with K index = kh*blk_k + wc*Cin + ci,
    and bias (1, pad_out) f32 tiled over the pooled-W positions.
    """
    w = np.asarray(w, np.float32)
    b = np.asarray(b, np.float32)
    Cout, Cin, KH, KW = w.shape
    OW = W_in - KW + 1
    PW = OW // 2
    T = np.zeros((2, KH, blk_k, pad_out), np.float32)
    for ph in range(2):
        for kh in range(KH):
            for kw in range(KW):
                for j in range(PW):
                    wc = 2 * j + ph + kw
                    T[ph, kh, wc * Cin:(wc + 1) * Cin, j * Cout:(j + 1) * Cout] += w[:, :, kh, kw].T
    Tf = T.reshape(2, KH * blk_k, pad_out)
    if KH * blk_k < k_total:
        Tf = np.concatenate(
            [Tf, np.zeros((2, k_total - KH * blk_k, pad_out), np.float32)], axis=1)
    bias = np.zeros((1, pad_out), np.float32)
    bias[0, :PW * Cout] = np.tile(b, PW)
    return jnp.asarray(Tf, jnp.bfloat16), jnp.asarray(bias)


def build_fc1_table(fc1_w, fc1_b, PH, PW, C, lane_pad, out_pad):
    """fc1 weights reorganized to K = i*lane_pad + (j*C + c), lane-padded.

    PyTorch flatten order of (C, PH, PW) is c*PH*PW + i*PW + j; the kernel's
    flattened pooled feature vector stores row i at lane block i*lane_pad with
    lane index j*C + c inside the block.
    """
    w = np.asarray(fc1_w, np.float32)
    out_dim = w.shape[0]
    W1 = np.zeros((PH, lane_pad, out_pad), np.float32)
    for i in range(PH):
        for j in range(PW):
            for c in range(C):
                W1[i, j * C + c, :out_dim] = w[:, c * PH * PW + i * PW + j]
    b1 = np.zeros((1, out_pad), np.float32)
    b1[0, :out_dim] = np.asarray(fc1_b, np.float32)
    return jnp.asarray(W1.reshape(PH * lane_pad, out_pad), jnp.bfloat16), jnp.asarray(b1)


def pad_fc(w, b, in_pad, out_pad):
    """(out, in) PyTorch linear -> zero-padded bf16 (in_pad, out_pad) operand + f32 bias."""
    w = np.asarray(w, np.float32)
    out_dim, in_dim = w.shape
    wp = np.zeros((in_pad, out_pad), np.float32)
    wp[:in_dim, :out_dim] = w.T
    bp = np.zeros((1, out_pad), np.float32)
    bp[0, :out_dim] = np.asarray(b, np.float32)
    return jnp.asarray(wp, jnp.bfloat16), jnp.asarray(bp)


# ---------------------------- reference forward -----------------------------

def reference_forward(x, p):
    def conv(x, w, b):
        y = jax.lax.conv_general_dilated(
            x, w, (1, 1), "VALID", dimension_numbers=("NCHW", "OIHW", "NCHW"))
        return y + b[None, :, None, None]

    def maxpool2(x):
        return jax.lax.reduce_window(x, -jnp.inf, jax.lax.max,
                                     (1, 1, 2, 2), (1, 1, 2, 2), "VALID")

    h = maxpool2(jax.nn.relu(conv(x, p["conv1_w"], p["conv1_b"])))
    h = maxpool2(jax.nn.relu(conv(h, p["conv2_w"], p["conv2_b"])))
    h = h.reshape(x.shape[0], -1)
    h = jax.nn.relu(h @ p["fc1_w"].T + p["fc1_b"])
    h = jax.nn.relu(h @ p["fc2_w"].T + p["fc2_b"])
    return h @ p["fc3_w"].T + p["fc3_b"]


# ----------------------------------- main -----------------------------------

if __name__ == "__main__":
    key = jax.random.PRNGKey(0)
    ks = jax.random.split(key, 11)

    # Deterministic synthetic parameters (PyTorch layouts).
    conv1_w = 0.2 * jax.random.normal(ks[0], (6, 1, 3, 3), jnp.float32)
    conv1_b = 0.1 * jax.random.normal(ks[1], (6,), jnp.float32)
    conv2_w = 0.1 * jax.random.normal(ks[2], (16, 6, 3, 3), jnp.float32)
    conv2_b = 0.1 * jax.random.normal(ks[3], (16,), jnp.float32)
    fc1_w = 0.05 * jax.random.normal(ks[4], (120, 16 * 6 * 6), jnp.float32)
    fc1_b = 0.1 * jax.random.normal(ks[5], (120,), jnp.float32)
    fc2_w = 0.1 * jax.random.normal(ks[6], (84, 120), jnp.float32)
    fc2_b = 0.1 * jax.random.normal(ks[7], (84,), jnp.float32)
    fc3_w = 0.1 * jax.random.normal(ks[8], (10, 84), jnp.float32)
    fc3_b = 0.1 * jax.random.normal(ks[9], (10,), jnp.float32)

    raw = dict(conv1_w=conv1_w, conv1_b=conv1_b, conv2_w=conv2_w, conv2_b=conv2_b,
               fc1_w=fc1_w, fc1_b=fc1_b, fc2_w=fc2_w, fc2_b=fc2_b,
               fc3_w=fc3_w, fc3_b=fc3_b)

    # Kernel-side K-folded, lane-padded, bf16 parameter tables (glue).
    tables = dict(
        conv1=build_conv_tables(conv1_w, conv1_b, W_in=32, blk_k=32,
                                k_total=LANES, pad_out=LANES),        # (2,128,128)
        conv2=build_conv_tables(conv2_w, conv2_b, W_in=15, blk_k=LANES,
                                k_total=3 * LANES, pad_out=LANES),    # (2,384,128)
        fc1=build_fc1_table(fc1_w, fc1_b, PH=6, PW=6, C=16,
                            lane_pad=LANES, out_pad=LANES),           # (768,128)
        fc2=pad_fc(fc2_w, fc2_b, in_pad=LANES, out_pad=LANES),
        fc3=pad_fc(fc3_w, fc3_b, in_pad=LANES, out_pad=LANES),
    )

    # Input: LeNet-style Net requires 1x32x32 images; batch = 2.
    x = jax.random.normal(ks[10], (2, 1, 32, 32), jnp.float32)

    out = jax.block_until_ready(net_forward_pallas(x, tables))
    assert out.shape == (2, 10) and out.dtype == jnp.float32

    ref = jax.block_until_ready(reference_forward(x, raw))
    # Weights / matmul activations are stored in bf16 (f32 accumulation & biases),
    # so tolerance reflects bf16 precision rather than the previous pure-f32 path.
    np.testing.assert_allclose(np.asarray(out), np.asarray(ref), rtol=3e-2, atol=3e-2)

    print("KERNEL_OK")
</pallas_src>

<mosaic_0001>
module attributes {stable_mosaic.version = 11 : i64} {
  func.func @net_kernel(%arg0: i32, %arg1: memref<60x128xbf16, #tpu.memory_space<vmem>>, %arg2: memref<2x128x128xbf16, #tpu.memory_space<vmem>>, %arg3: memref<1x128xf32, #tpu.memory_space<vmem>>, %arg4: memref<2x384x128xbf16, #tpu.memory_space<vmem>>, %arg5: memref<1x128xf32, #tpu.memory_space<vmem>>, %arg6: memref<768x128xbf16, #tpu.memory_space<vmem>>, %arg7: memref<1x128xf32, #tpu.memory_space<vmem>>, %arg8: memref<128x128xbf16, #tpu.memory_space<vmem>>, %arg9: memref<1x128xf32, #tpu.memory_space<vmem>>, %arg10: memref<128x128xbf16, #tpu.memory_space<vmem>>, %arg11: memref<1x128xf32, #tpu.memory_space<vmem>>, %arg12: memref<2x128xf32, #tpu.memory_space<vmem>>, %arg13: memref<60x128xf32, #tpu.memory_space<vmem>>, %arg14: memref<30x128xf32, #tpu.memory_space<vmem>>, %arg15: memref<28x128xf32, #tpu.memory_space<vmem>>, %arg16: memref<2x768xf32, #tpu.memory_space<vmem>>) attributes {dimension_semantics = [#tpu.dimension_semantics<arbitrary>], iteration_bounds = array<i64: 1>, scalar_prefetch = 0 : i64, scratch_operands = 4 : i64, tpu.core_type = #tpu.core_type<tc>, window_params = [{pipeline_mode = #tpu.pipeline_mode<synchronous>, transform_indices = @transform_0, window_bounds = array<i64: 60, 128>}, {pipeline_mode = #tpu.pipeline_mode<synchronous>, transform_indices = @transform_1, window_bounds = array<i64: 2, 128, 128>}, {pipeline_mode = #tpu.pipeline_mode<synchronous>, transform_indices = @transform_2, window_bounds = array<i64: 1, 128>}, {pipeline_mode = #tpu.pipeline_mode<synchronous>, transform_indices = @transform_3, window_bounds = array<i64: 2, 384, 128>}, {pipeline_mode = #tpu.pipeline_mode<synchronous>, transform_indices = @transform_4, window_bounds = array<i64: 1, 128>}, {pipeline_mode = #tpu.pipeline_mode<synchronous>, transform_indices = @transform_5, window_bounds = array<i64: 768, 128>}, {pipeline_mode = #tpu.pipeline_mode<synchronous>, transform_indices = @transform_6, window_bounds = array<i64: 1, 128>}, {pipeline_mode = #tpu.pipeline_mode<synchronous>, transform_indices = @transform_7, window_bounds = array<i64: 128, 128>}, {pipeline_mode = #tpu.pipeline_mode<synchronous>, transform_indices = @transform_8, window_bounds = array<i64: 1, 128>}, {pipeline_mode = #tpu.pipeline_mode<synchronous>, transform_indices = @transform_9, window_bounds = array<i64: 128, 128>}, {pipeline_mode = #tpu.pipeline_mode<synchronous>, transform_indices = @transform_10, window_bounds = array<i64: 1, 128>}, {pipeline_mode = #tpu.pipeline_mode<synchronous>, transform_indices = @transform_11, window_bounds = array<i64: 2, 128>}]} {
    %c0 = arith.constant 0 : index
    %c0_0 = arith.constant 0 : index
    %0 = vector.load %arg1[%c0, %c0_0] : memref<60x128xbf16, #tpu.memory_space<vmem>>, vector<60x128xbf16>
    %c0_1 = arith.constant 0 : index
    %c0_2 = arith.constant 0 : index
    %c0_3 = arith.constant 0 : index
    %1 = vector.load %arg2[%c0_1, %c0_2, %c0_3] : memref<2x128x128xbf16, #tpu.memory_space<vmem>>, vector<1x128x128xbf16>
    %2 = vector.shape_cast %1 : vector<1x128x128xbf16> to vector<128x128xbf16>
    %cst = arith.constant dense<0.000000e+00> : vector<60x128xf32>
    %3 = tpu.matmul %0, %2, %cst {dimension_numbers = #tpu.dot_dimension_numbers<[1], [0], [0], [1], [0, 0, 1, 1], [], []>} : vector<60x128xbf16>, vector<128x128xbf16>, vector<60x128xf32> -> vector<60x128xf32>
    %c1 = arith.constant 1 : index
    %c0_4 = arith.constant 0 : index
    %c0_5 = arith.constant 0 : index
    %4 = vector.load %arg2[%c1, %c0_4, %c0_5] : memref<2x128x128xbf16, #tpu.memory_space<vmem>>, vector<1x128x128xbf16>
    %5 = vector.shape_cast %4 : vector<1x128x128xbf16> to vector<128x128xbf16>
    %cst_6 = arith.constant dense<0.000000e+00> : vector<60x128xf32>
    %6 = tpu.matmul %0, %5, %cst_6 {dimension_numbers = #tpu.dot_dimension_numbers<[1], [0], [0], [1], [0, 0, 1, 1], [], []>} : vector<60x128xbf16>, vector<128x128xbf16>, vector<60x128xf32> -> vector<60x128xf32>
    %7 = arith.maximumf %3, %6 : vector<60x128xf32>
    %c0_7 = arith.constant 0 : index
    %c0_8 = arith.constant 0 : index
    %8 = vector.load %arg3[%c0_7, %c0_8] : memref<1x128xf32, #tpu.memory_space<vmem>>, vector<1x128xf32>
    %9 = vector.broadcast %8 : vector<1x128xf32> to vector<60x128xf32>
    %10 = arith.addf %7, %9 : vector<60x128xf32>
    %cst_9 = arith.constant 0.000000e+00 : f32
    %11 = vector.broadcast %cst_9 : f32 to vector<60x128xf32>
    %12 = arith.maximumf %10, %11 : vector<60x128xf32>
    %c0_10 = arith.constant 0 : index
    %c0_11 = arith.constant 0 : index
    %13 = vector.load %arg13[%c0_10, %c0_11] : memref<60x128xf32, #tpu.memory_space<vmem>>, vector<60x128xf32>
    tpu.vector_store %arg13[%c0_10, %c0_11], %12 {strides = array<i32>} : memref<60x128xf32, #tpu.memory_space<vmem>>, vector<60x128xf32>,
    %c0_12 = arith.constant 0 : index
    %c0_13 = arith.constant 0 : index
    %14 = tpu.strided_load %arg13[%c0_12, %c0_13] {strides = array<i32: 2, 1>} : memref<60x128xf32, #tpu.memory_space<vmem>>, vector<30x128xf32>
    %c1_14 = arith.constant 1 : index
    %c0_15 = arith.constant 0 : index
    %15 = tpu.strided_load %arg13[%c1_14, %c0_15] {strides = array<i32: 2, 1>} : memref<60x128xf32, #tpu.memory_space<vmem>>, vector<30x128xf32>
    %16 = arith.maximumf %14, %15 : vector<30x128xf32>
    %c0_16 = arith.constant 0 : index
    %c0_17 = arith.constant 0 : index
    %17 = vector.load %arg14[%c0_16, %c0_17] : memref<30x128xf32, #tpu.memory_space<vmem>>, vector<30x128xf32>
    tpu.vector_store %arg14[%c0_16, %c0_17], %16 {strides = array<i32>} : memref<30x128xf32, #tpu.memory_space<vmem>>, vector<30x128xf32>,
    %c0_18 = arith.constant 0 : index
    %c0_19 = arith.constant 0 : index
    %18 = vector.load %arg14[%c0_18, %c0_19] : memref<30x128xf32, #tpu.memory_space<vmem>>, vector<28x128xf32>
    %c1_20 = arith.constant 1 : index
    %c0_21 = arith.constant 0 : index
    %19 = vector.load %arg14[%c1_20, %c0_21] : memref<30x128xf32, #tpu.memory_space<vmem>>, vector<28x128xf32>
    %c2 = arith.constant 2 : index
    %c0_22 = arith.constant 0 : index
    %20 = vector.load %arg14[%c2, %c0_22] : memref<30x128xf32, #tpu.memory_space<vmem>>, vector<28x128xf32>
    %21 = tpu.concatenate %18, %19, %20 in 1 : vector<28x128xf32>, vector<28x128xf32>, vector<28x128xf32> -> vector<28x384xf32>
    %22 = arith.truncf %21 : vector<28x384xf32> to vector<28x384xbf16>
    %c0_23 = arith.constant 0 : index
    %c0_24 = arith.constant 0 : index
    %c0_25 = arith.constant 0 : index
    %23 = vector.load %arg4[%c0_23, %c0_24, %c0_25] : memref<2x384x128xbf16, #tpu.memory_space<vmem>>, vector<1x384x128xbf16>
    %24 = vector.shape_cast %23 : vector<1x384x128xbf16> to vector<384x128xbf16>
    %cst_26 = arith.constant dense<0.000000e+00> : vector<28x128xf32>
    %25 = tpu.matmul %22, %24, %cst_26 {dimension_numbers = #tpu.dot_dimension_numbers<[1], [0], [0], [1], [0, 0, 1, 1], [], []>} : vector<28x384xbf16>, vector<384x128xbf16>, vector<28x128xf32> -> vector<28x128xf32>
    %c1_27 = arith.constant 1 : index
    %c0_28 = arith.constant 0 : index
    %c0_29 = arith.constant 0 : index
    %26 = vector.load %arg4[%c1_27, %c0_28, %c0_29] : memref<2x384x128xbf16, #tpu.memory_space<vmem>>, vector<1x384x128xbf16>
    %27 = vector.shape_cast %26 : vector<1x384x128xbf16> to vector<384x128xbf16>
    %cst_30 = arith.constant dense<0.000000e+00> : vector<28x128xf32>
    %28 = tpu.matmul %22, %27, %cst_30 {dimension_numbers = #tpu.dot_dimension_numbers<[1], [0], [0], [1], [0, 0, 1, 1], [], []>} : vector<28x384xbf16>, vector<384x128xbf16>, vector<28x128xf32> -> vector<28x128xf32>
    %29 = arith.maximumf %25, %28 : vector<28x128xf32>
    %c0_31 = arith.constant 0 : index
    %c0_32 = arith.constant 0 : index
    %30 = vector.load %arg5[%c0_31, %c0_32] : memref<1x128xf32, #tpu.memory_space<vmem>>, vector<1x128xf32>
    %31 = vector.broadcast %30 : vector<1x128xf32> to vector<28x128xf32>
    %32 = arith.addf %29, %31 : vector<28x128xf32>
    %cst_33 = arith.constant 0.000000e+00 : f32
    %33 = vector.broadcast %cst_33 : f32 to vector<28x128xf32>
    %34 = arith.maximumf %32, %33 : vector<28x128xf32>
    %c0_34 = arith.constant 0 : index
    %c0_35 = arith.constant 0 : index
    %35 = vector.load %arg15[%c0_34, %c0_35] : memref<28x128xf32, #tpu.memory_space<vmem>>, vector<28x128xf32>
    tpu.vector_store %arg15[%c0_34, %c0_35], %34 {strides = array<i32>} : memref<28x128xf32, #tpu.memory_space<vmem>>, vector<28x128xf32>,
    %c0_36 = arith.constant 0 : index
    %c0_37 = arith.constant 0 : index
    %36 = vector.load %arg15[%c0_36, %c0_37] : memref<28x128xf32, #tpu.memory_space<vmem>>, vector<1x128xf32>
    %c1_38 = arith.constant 1 : index
    %c0_39 = arith.constant 0 : index
    %37 = vector.load %arg15[%c1_38, %c0_39] : memref<28x128xf32, #tpu.memory_space<vmem>>, vector<1x128xf32>
    %38 = arith.maximumf %36, %37 : vector<1x128xf32>
    %c2_40 = arith.constant 2 : index
    %c0_41 = arith.constant 0 : index
    %39 = vector.load %arg15[%c2_40, %c0_41] : memref<28x128xf32, #tpu.memory_space<vmem>>, vector<1x128xf32>
    %c3 = arith.constant 3 : index
    %c0_42 = arith.constant 0 : index
    %40 = vector.load %arg15[%c3, %c0_42] : memref<28x128xf32, #tpu.memory_space<vmem>>, vector<1x128xf32>
    %41 = arith.maximumf %39, %40 : vector<1x128xf32>
    %c4 = arith.constant 4 : index
    %c0_43 = arith.constant 0 : index
    %42 = vector.load %arg15[%c4, %c0_43] : memref<28x128xf32, #tpu.memory_space<vmem>>, vector<1x128xf32>
    %c5 = arith.constant 5 : index
    %c0_44 = arith.constant 0 : index
    %43 = vector.load %arg15[%c5, %c0_44] : memref<28x128xf32, #tpu.memory_space<vmem>>, vector<1x128xf32>
    %44 = arith.maximumf %42, %43 : vector<1x128xf32>
    %c6 = arith.constant 6 : index
    %c0_45 = arith.constant 0 : index
    %45 = vector.load %arg15[%c6, %c0_45] : memref<28x128xf32, #tpu.memory_space<vmem>>, vector<1x128xf32>
    %c7 = arith.constant 7 : index
    %c0_46 = arith.constant 0 : index
    %46 = vector.load %arg15[%c7, %c0_46] : memref<28x128xf32, #tpu.memory_space<vmem>>, vector<1x128xf32>
    %47 = arith.maximumf %45, %46 : vector<1x128xf32>
    %c8 = arith.constant 8 : index
    %c0_47 = arith.constant 0 : index
    %48 = vector.load %arg15[%c8, %c0_47] : memref<28x128xf32, #tpu.memory_space<vmem>>, vector<1x128xf32>
    %c9 = arith.constant 9 : index
    %c0_48 = arith.constant 0 : index
    %49 = vector.load %arg15[%c9, %c0_48] : memref<28x128xf32, #tpu.memory_space<vmem>>, vector<1x128xf32>
    %50 = arith.maximumf %48, %49 : vector<1x128xf32>
    %c10 = arith.constant 10 : index
    %c0_49 = arith.constant 0 : index
    %51 = vector.load %arg15[%c10, %c0_49] : memref<28x128xf32, #tpu.memory_space<vmem>>, vector<1x128xf32>
    %c11 = arith.constant 11 : index
    %c0_50 = arith.constant 0 : index
    %52 = vector.load %arg15[%c11, %c0_50] : memref<28x128xf32, #tpu.memory_space<vmem>>, vector<1x128xf32>
    %53 = arith.maximumf %51, %52 : vector<1x128xf32>
    %54 = tpu.concatenate %38, %41, %44, %47, %50, %53 in 1 : vector<1x128xf32>, vector<1x128xf32>, vector<1x128xf32>, vector<1x128xf32>, vector<1x128xf32>, vector<1x128xf32> -> vector<1x768xf32>
    %c0_51 = arith.constant 0 : index
    %c0_52 = arith.constant 0 : index
    %55 = vector.load %arg16[%c0_51, %c0_52] : memref<2x768xf32, #tpu.memory_space<vmem>>, vector<1x768xf32>
    tpu.vector_store %arg16[%c0_51, %c0_52], %54 {strides = array<i32>} : memref<2x768xf32, #tpu.memory_space<vmem>>, vector<1x768xf32>,
    %c15 = arith.constant 15 : index
    %c0_53 = arith.constant 0 : index
    %56 = vector.load %arg15[%c15, %c0_53] : memref<28x128xf32, #tpu.memory_space<vmem>>, vector<1x128xf32>
    %c16 = arith.constant 16 : index
    %c0_54 = arith.constant 0 : index
    %57 = vector.load %arg15[%c16, %c0_54] : memref<28x128xf32, #tpu.memory_space<vmem>>, vector<1x128xf32>
    %58 = arith.maximumf %56, %57 : vector<1x128xf32>
    %c17 = arith.constant 17 : index
    %c0_55 = arith.constant 0 : index
    %59 = vector.load %arg15[%c17, %c0_55] : memref<28x128xf32, #tpu.memory_space<vmem>>, vector<1x128xf32>
    %c18 = arith.constant 18 : index
    %c0_56 = arith.constant 0 : index
    %60 = vector.load %arg15[%c18, %c0_56] : memref<28x128xf32, #tpu.memory_space<vmem>>, vector<1x128xf32>
    %61 = arith.maximumf %59, %60 : vector<1x128xf32>
    %c19 = arith.constant 19 : index
    %c0_57 = arith.constant 0 : index
    %62 = vector.load %arg15[%c19, %c0_57] : memref<28x128xf32, #tpu.memory_space<vmem>>, vector<1x128xf32>
    %c20 = arith.constant 20 : index
    %c0_58 = arith.constant 0 : index
    %63 = vector.load %arg15[%c20, %c0_58] : memref<28x128xf32, #tpu.memory_space<vmem>>, vector<1x128xf32>
    %64 = arith.maximumf %62, %63 : vector<1x128xf32>
    %c21 = arith.constant 21 : index
    %c0_59 = arith.constant 0 : index
    %65 = vector.load %arg15[%c21, %c0_59] : memref<28x128xf32, #tpu.memory_space<vmem>>, vector<1x128xf32>
    %c22 = arith.constant 22 : index
    %c0_60 = arith.constant 0 : index
    %66 = vector.load %arg15[%c22, %c0_60] : memref<28x128xf32, #tpu.memory_space<vmem>>, vector<1x128xf32>
    %67 = arith.maximumf %65, %66 : vector<1x128xf32>
    %c23 = arith.constant 23 : index
    %c0_61 = arith.constant 0 : index
    %68 = vector.load %arg15[%c23, %c0_61] : memref<28x128xf32, #tpu.memory_space<vmem>>, vector<1x128xf32>
    %c24 = arith.constant 24 : index
    %c0_62 = arith.constant 0 : index
    %69 = vector.load %arg15[%c24, %c0_62] : memref<28x128xf32, #tpu.memory_space<vmem>>, vector<1x128xf32>
    %70 = arith.maximumf %68, %69 : vector<1x128xf32>
    %c25 = arith.constant 25 : index
    %c0_63 = arith.constant 0 : index
    %71 = vector.load %arg15[%c25, %c0_63] : memref<28x128xf32, #tpu.memory_space<vmem>>, vector<1x128xf32>
    %c26 = arith.constant 26 : index
    %c0_64 = arith.constant 0 : index
    %72 = vector.load %arg15[%c26, %c0_64] : memref<28x128xf32, #tpu.memory_space<vmem>>, vector<1x128xf32>
    %73 = arith.maximumf %71, %72 : vector<1x128xf32>
    %74 = tpu.concatenate %58, %61, %64, %67, %70, %73 in 1 : vector<1x128xf32>, vector<1x128xf32>, vector<1x128xf32>, vector<1x128xf32>, vector<1x128xf32>, vector<1x128xf32> -> vector<1x768xf32>
    %c1_65 = arith.constant 1 : index
    %c0_66 = arith.constant 0 : index
    %75 = vector.load %arg16[%c1_65, %c0_66] : memref<2x768xf32, #tpu.memory_space<vmem>>, vector<1x768xf32>
    tpu.vector_store %arg16[%c1_65, %c0_66], %74 {strides = array<i32>} : memref<2x768xf32, #tpu.memory_space<vmem>>, vector<1x768xf32>,
    %c0_67 = arith.constant 0 : index
    %c0_68 = arith.constant 0 : index
    %76 = vector.load %arg16[%c0_67, %c0_68] : memref<2x768xf32, #tpu.memory_space<vmem>>, vector<2x768xf32>
    %77 = arith.truncf %76 : vector<2x768xf32> to vector<2x768xbf16>
    %c0_69 = arith.constant 0 : index
    %c0_70 = arith.constant 0 : index
    %78 = vector.load %arg6[%c0_69, %c0_70] : memref<768x128xbf16, #tpu.memory_space<vmem>>, vector<768x128xbf16>
    %cst_71 = arith.constant dense<0.000000e+00> : vector<2x128xf32>
    %79 = tpu.matmul %77, %78, %cst_71 {dimension_numbers = #tpu.dot_dimension_numbers<[1], [0], [0], [1], [0, 0, 1, 1], [], []>} : vector<2x768xbf16>, vector<768x128xbf16>, vector<2x128xf32> -> vector<2x128xf32>
    %c0_72 = arith.constant 0 : index
    %c0_73 = arith.constant 0 : index
    %80 = vector.load %arg7[%c0_72, %c0_73] : memref<1x128xf32, #tpu.memory_space<vmem>>, vector<1x128xf32>
    %81 = vector.broadcast %80 : vector<1x128xf32> to vector<2x128xf32>
    %82 = arith.addf %79, %81 : vector<2x128xf32>
    %cst_74 = arith.constant 0.000000e+00 : f32
    %83 = vector.broadcast %cst_74 : f32 to vector<2x128xf32>
    %84 = arith.maximumf %82, %83 : vector<2x128xf32>
    %85 = arith.truncf %84 : vector<2x128xf32> to vector<2x128xbf16>
    %c0_75 = arith.constant 0 : index
    %c0_76 = arith.constant 0 : index
    %86 = vector.load %arg8[%c0_75, %c0_76] : memref<128x128xbf16, #tpu.memory_space<vmem>>, vector<128x128xbf16>
    %cst_77 = arith.constant dense<0.000000e+00> : vector<2x128xf32>
    %87 = tpu.matmul %85, %86, %cst_77 {dimension_numbers = #tpu.dot_dimension_numbers<[1], [0], [0], [1], [0, 0, 1, 1], [], []>} : vector<2x128xbf16>, vector<128x128xbf16>, vector<2x128xf32> -> vector<2x128xf32>
    %c0_78 = arith.constant 0 : index
    %c0_79 = arith.constant 0 : index
    %88 = vector.load %arg9[%c0_78, %c0_79] : memref<1x128xf32, #tpu.memory_space<vmem>>, vector<1x128xf32>
    %89 = vector.broadcast %88 : vector<1x128xf32> to vector<2x128xf32>
    %90 = arith.addf %87, %89 : vector<2x128xf32>
    %cst_80 = arith.constant 0.000000e+00 : f32
    %91 = vector.broadcast %cst_80 : f32 to vector<2x128xf32>
    %92 = arith.maximumf %90, %91 : vector<2x128xf32>
    %93 = arith.truncf %92 : vector<2x128xf32> to vector<2x128xbf16>
    %c0_81 = arith.constant 0 : index
    %c0_82 = arith.constant 0 : index
    %94 = vector.load %arg10[%c0_81, %c0_82] : memref<128x128xbf16, #tpu.memory_space<vmem>>, vector<128x128xbf16>
    %cst_83 = arith.constant dense<0.000000e+00> : vector<2x128xf32>
    %95 = tpu.matmul %93, %94, %cst_83 {dimension_numbers = #tpu.dot_dimension_numbers<[1], [0], [0], [1], [0, 0, 1, 1], [], []>} : vector<2x128xbf16>, vector<128x128xbf16>, vector<2x128xf32> -> vector<2x128xf32>
    %c0_84 = arith.constant 0 : index
    %c0_85 = arith.constant 0 : index
    %96 = vector.load %arg11[%c0_84, %c0_85] : memref<1x128xf32, #tpu.memory_space<vmem>>, vector<1x128xf32>
    %97 = vector.broadcast %96 : vector<1x128xf32> to vector<2x128xf32>
    %98 = arith.addf %95, %97 : vector<2x128xf32>
    %c0_86 = arith.constant 0 : index
    %c0_87 = arith.constant 0 : index
    %99 = vector.load %arg12[%c0_86, %c0_87] : memref<2x128xf32, #tpu.memory_space<vmem>>, vector<2x128xf32>
    tpu.vector_store %arg12[%c0_86, %c0_87], %98 {strides = array<i32>} : memref<2x128xf32, #tpu.memory_space<vmem>>, vector<2x128xf32>,
    return
  }
  func.func @transform_0(%arg0: i32) -> (i32, i32) {
    %c0_i32 = arith.constant 0 : i32
    %c0_i32_0 = arith.constant 0 : i32
    %c0_i32_1 = arith.constant 0 : i32
    return %c0_i32, %c0_i32_0 : i32, i32
  }
  func.func @transform_1(%arg0: i32) -> (i32, i32, i32) {
    %c0_i32 = arith.constant 0 : i32
    %c0_i32_0 = arith.constant 0 : i32
    %c0_i32_1 = arith.constant 0 : i32
    %c0_i32_2 = arith.constant 0 : i32
    return %c0_i32, %c0_i32_0, %c0_i32_1 : i32, i32, i32
  }
  func.func @transform_2(%arg0: i32) -> (i32, i32) {
    %c0_i32 = arith.constant 0 : i32
    %c0_i32_0 = arith.constant 0 : i32
    %c0_i32_1 = arith.constant 0 : i32
    return %c0_i32, %c0_i32_0 : i32, i32
  }
  func.func @transform_3(%arg0: i32) -> (i32, i32, i32) {
    %c0_i32 = arith.constant 0 : i32
    %c0_i32_0 = arith.constant 0 : i32
    %c0_i32_1 = arith.constant 0 : i32
    %c0_i32_2 = arith.constant 0 : i32
    return %c0_i32, %c0_i32_0, %c0_i32_1 : i32, i32, i32
  }
  func.func @transform_4(%arg0: i32) -> (i32, i32) {
    %c0_i32 = arith.constant 0 : i32
    %c0_i32_0 = arith.constant 0 : i32
    %c0_i32_1 = arith.constant 0 : i32
    return %c0_i32, %c0_i32_0 : i32, i32
  }
  func.func @transform_5(%arg0: i32) -> (i32, i32) {
    %c0_i32 = arith.constant 0 : i32
    %c0_i32_0 = arith.constant 0 : i32
    %c0_i32_1 = arith.constant 0 : i32
    return %c0_i32, %c0_i32_0 : i32, i32
  }
  func.func @transform_6(%arg0: i32) -> (i32, i32) {
    %c0_i32 = arith.constant 0 : i32
    %c0_i32_0 = arith.constant 0 : i32
    %c0_i32_1 = arith.constant 0 : i32
    return %c0_i32, %c0_i32_0 : i32, i32
  }
  func.func @transform_7(%arg0: i32) -> (i32, i32) {
    %c0_i32 = arith.constant 0 : i32
    %c0_i32_0 = arith.constant 0 : i32
    %c0_i32_1 = arith.constant 0 : i32
    return %c0_i32, %c0_i32_0 : i32, i32
  }
  func.func @transform_8(%arg0: i32) -> (i32, i32) {
    %c0_i32 = arith.constant 0 : i32
    %c0_i32_0 = arith.constant 0 : i32
    %c0_i32_1 = arith.constant 0 : i32
    return %c0_i32, %c0_i32_0 : i32, i32
  }
  func.func @transform_9(%arg0: i32) -> (i32, i32) {
    %c0_i32 = arith.constant 0 : i32
    %c0_i32_0 = arith.constant 0 : i32
    %c0_i32_1 = arith.constant 0 : i32
    return %c0_i32, %c0_i32_0 : i32, i32
  }
  func.func @transform_10(%arg0: i32) -> (i32, i32) {
    %c0_i32 = arith.constant 0 : i32
    %c0_i32_0 = arith.constant 0 : i32
    %c0_i32_1 = arith.constant 0 : i32
    return %c0_i32, %c0_i32_0 : i32, i32
  }
  func.func @transform_11(%arg0: i32) -> (i32, i32) {
    %c0_i32 = arith.constant 0 : i32
    %c0_i32_0 = arith.constant 0 : i32
    %c0_i32_1 = arith.constant 0 : i32
    return %c0_i32, %c0_i32_0 : i32, i32
  }
}

</mosaic_0001>

<llo_original>
// kernel: net_forward_pallas.1
$region0: #{net_forward_pallas.1}
  #allocation0 [shape = 'u32[]', space=smem, size = 0x4, offset = 0x4, fixed_abs, tag = 'smem constant byte address 0x4 - core index']
  #allocation1 [shape = 'u32[144,128]{1,0:T(1,128)}', space=vmem, size = 0x12000, scoped, tag = 'internal scratch']
  #allocation2 [shape = 'f32[60,128]{1,0:T(8,128)}', space=vmem, size = 0x8000, scoped, tag = 'scratch operand']
  #allocation3 [shape = 'f32[30,128]{1,0:T(8,128)}', space=vmem, size = 0x4000, scoped, tag = 'scratch operand']
  #allocation4 [shape = 'f32[28,128]{1,0:T(8,128)}', space=vmem, size = 0x4000, scoped, tag = 'scratch operand']
  #allocation5 [shape = 'f32[2,768]{1,0:T(2,128)}', space=vmem, size = 0x1800, scoped, tag = 'scratch operand']
  %s0 = inlined_call_operand.vmem [shape: bf16[60,128], index: 0, kind: input, shape index: {}]
  %s1 = inlined_call_operand.hbm [shape: bf16[2,128,128], index: 1, kind: input, shape index: {}]
  %s2 = inlined_call_operand.vmem [shape: f32[1,128], index: 2, kind: input, shape index: {}]
  %s3 = inlined_call_operand.vmem [shape: bf16[2,384,128], index: 3, kind: input, shape index: {}]
  %s4 = inlined_call_operand.vmem [shape: f32[1,128], index: 4, kind: input, shape index: {}]
  %s5 = inlined_call_operand.hbm [shape: bf16[768,128], index: 5, kind: input, shape index: {}]
  %s6 = inlined_call_operand.vmem [shape: f32[1,128], index: 6, kind: input, shape index: {}]
  %s7 = inlined_call_operand.vmem [shape: bf16[128,128], index: 7, kind: input, shape index: {}]
  %s8 = inlined_call_operand.vmem [shape: f32[1,128], index: 8, kind: input, shape index: {}]
  %s9 = inlined_call_operand.hbm [shape: bf16[128,128], index: 9, kind: input, shape index: {}]
  %s10 = inlined_call_operand.vmem [shape: f32[1,128], index: 10, kind: input, shape index: {}]
  %s11 = inlined_call_operand.hbm [shape: f32[2,128], index: 11, kind: output, shape index: {}]
  %s12 = sld [smem:[#allocation0]]
  $region66: #{net_forward_pallas.1} parent=0
    _
  %s14 = ssub.s32 1, %s12
  %s15 = scalar_select 0, %s14, %s12
  $region1: #{net_forward_pallas.1} parent=0
    #allocation6 [shape = 'u8[65536]{0}', space=vmem, size = 0x10000, scoped, tag = 'input window, operand 1, single buffered']
    #allocation7 [shape = 's32[1]{0}', space=sflag, size = 0x4, scoped, tag = 'scoped memory for net_forward_pallas.1']
    #allocation8 [shape = 's32[1]{0}', space=sflag, size = 0x4, scoped, tag = 'scoped memory for net_forward_pallas.1']
    #allocation9 [shape = 'u8[196608]{0}', space=vmem, size = 0x30000, scoped, tag = 'input window, operand 5, single buffered']
    #allocation10 [shape = 's32[1]{0}', space=sflag, size = 0x4, scoped, tag = 'scoped memory for net_forward_pallas.1']
    #allocation11 [shape = 'u8[32768]{0}', space=vmem, size = 0x8000, scoped, tag = 'input window, operand 9, single buffered']
    #allocation12 [shape = 'u8[1024]{0}', space=vmem, size = 0x400, scoped, tag = 'output window, operand 0, single buffered']
    %16 = vsyncpa [#allocation7], 0
    %17 = vsyncpa [#allocation10], 0
    %18 = vsyncpa [#allocation8], 0
    // Predicated region
    $region2: #{net_forward_pallas.1} parent=1 // pred_check
      _
    $region3: #{net_forward_pallas.1} parent=1 // pred_check_branch
      %20 = sbr.rel (0) target = $region5
    $region4: #{net_forward_pallas.1} parent=1 // pred_region
      _
    $region5: #{net_forward_pallas.1} parent=1 // pred_fallthru
      _
    // Predicated region
    $region6: #{net_forward_pallas.1} parent=1 // pred_check
      _
    $region7: #{net_forward_pallas.1} parent=1 // pred_check_branch
      %22 = sbr.rel (0) target = $region9
    $region8: #{net_forward_pallas.1} parent=1 // pred_region
      %s24 = ssub.s32 2048, 2048
      %25 = vsyncadd [#allocation7], %s24
      %s26 = sshll.u32 [#allocation6], 4
      %s27 = int_to_ptr.vmem [resolvable:$true] %s26
      %32 = dma.hbm_to_vmem [thread:$0]  %s1, 2048, %s27, [#allocation7], 64, 64, 4
    $region9: #{net_forward_pallas.1} parent=1 // pred_fallthru
      _
    // Predicated region
    $region10: #{net_forward_pallas.1} parent=1 // pred_check
      _
    $region11: #{net_forward_pallas.1} parent=1 // pred_check_branch
      %34 = sbr.rel (0) target = $region13
    $region12: #{net_forward_pallas.1} parent=1 // pred_region
      _
    $region13: #{net_forward_pallas.1} parent=1 // pred_fallthru
      _
    // Predicated region
    $region14: #{net_forward_pallas.1} parent=1 // pred_check
      _
    $region15: #{net_forward_pallas.1} parent=1 // pred_check_branch
      %36 = sbr.rel (0) target = $region17
    $region16: #{net_forward_pallas.1} parent=1 // pred_region
      _
    $region17: #{net_forward_pallas.1} parent=1 // pred_fallthru
      _
    // Predicated region
    $region18: #{net_forward_pallas.1} parent=1 // pred_check
      _
    $region19: #{net_forward_pallas.1} parent=1 // pred_check_branch
      %38 = sbr.rel (0) target = $region21
    $region20: #{net_forward_pallas.1} parent=1 // pred_region
      _
    $region21: #{net_forward_pallas.1} parent=1 // pred_fallthru
      _
    // Predicated region
    $region22: #{net_forward_pallas.1} parent=1 // pred_check
      _
    $region23: #{net_forward_pallas.1} parent=1 // pred_check_branch
      %40 = sbr.rel (0) target = $region25
    $region24: #{net_forward_pallas.1} parent=1 // pred_region
      %s42 = ssub.s32 6144, 6144
      %43 = vsyncadd [#allocation10], %s42
      %s44 = sshll.u32 [#allocation9], 4
      %s45 = int_to_ptr.vmem [resolvable:$true] %s44
      %50 = dma.hbm_to_vmem [thread:$0]  %s5, 6144, %s45, [#allocation10], 64, 64, 4
    $region25: #{net_forward_pallas.1} parent=1 // pred_fallthru
      _
    // Predicated region
    $region26: #{net_forward_pallas.1} parent=1 // pred_check
      _
    $region27: #{net_forward_pallas.1} parent=1 // pred_check_branch
      %52 = sbr.rel (0) target = $region29
    $region28: #{net_forward_pallas.1} parent=1 // pred_region
      _
    $region29: #{net_forward_pallas.1} parent=1 // pred_fallthru
      _
    // Predicated region
    $region30: #{net_forward_pallas.1} parent=1 // pred_check
      _
    $region31: #{net_forward_pallas.1} parent=1 // pred_check_branch
      %54 = sbr.rel (0) target = $region33
    $region32: #{net_forward_pallas.1} parent=1 // pred_region
      _
    $region33: #{net_forward_pallas.1} parent=1 // pred_fallthru
      _
    // Predicated region
    $region34: #{net_forward_pallas.1} parent=1 // pred_check
      _
    $region35: #{net_forward_pallas.1} parent=1 // pred_check_branch
      %56 = sbr.rel (0) target = $region37
    $region36: #{net_forward_pallas.1} parent=1 // pred_region
      _
    $region37: #{net_forward_pallas.1} parent=1 // pred_fallthru
      _
    // Predicated region
    $region38: #{net_forward_pallas.1} parent=1 // pred_check
      _
    $region39: #{net_forward_pallas.1} parent=1 // pred_check_branch
      %58 = sbr.rel (0) target = $region41
    $region40: #{net_forward_pallas.1} parent=1 // pred_region
      %s60 = ssub.s32 1024, 1024
      %61 = vsyncadd [#allocation10], %s60
      %s62 = sshll.u32 [#allocation11], 4
      %s63 = int_to_ptr.vmem [resolvable:$true] %s62
      %68 = dma.hbm_to_vmem [thread:$0]  %s9, 1024, %s63, [#allocation10], 64, 64, 4
    $region41: #{net_forward_pallas.1} parent=1 // pred_fallthru
      _
    // Predicated region
    $region42: #{net_forward_pallas.1} parent=1 // pred_check
      _
    $region43: #{net_forward_pallas.1} parent=1 // pred_check_branch
      %70 = sbr.rel (0) target = $region45
    $region44: #{net_forward_pallas.1} parent=1 // pred_region
      _
    $region45: #{net_forward_pallas.1} parent=1 // pred_fallthru
      _
    // Predicated region
    $region46: #{net_forward_pallas.1} parent=1 // pred_check
      _
    $region47: #{net_forward_pallas.1} parent=1 // pred_check_branch
      %72 = sbr.rel (0) target = $region49
    $region48: #{net_forward_pallas.1} parent=1 // pred_region
      %73 = dma.done [#allocation7], 2048
    $region49: #{net_forward_pallas.1} parent=1 // pred_fallthru
      _
    // Predicated region
    $region50: #{net_forward_pallas.1} parent=1 // pred_check
      _
    $region51: #{net_forward_pallas.1} parent=1 // pred_check_branch
      %75 = sbr.rel (0) target = $region53
    $region52: #{net_forward_pallas.1} parent=1 // pred_region
      %76 = dma.done [#allocation10], 6144
    $region53: #{net_forward_pallas.1} parent=1 // pred_fallthru
      _
    // Predicated region
    $region54: #{net_forward_pallas.1} parent=1 // pred_check
      _
    $region55: #{net_forward_pallas.1} parent=1 // pred_check_branch
      %78 = sbr.rel (0) target = $region57
    $region56: #{net_forward_pallas.1} parent=1 // pred_region
      %79 = dma.done [#allocation10], 1024
    $region57: #{net_forward_pallas.1} parent=1 // pred_fallthru
      _
    %v81 = vld [vmem:[%s0] sm:$0xf]
    %v82 = vld [vmem:[%s0 + $0x4] sm:$0xf]
    %v83 = vld [vmem:[%s0 + $0x8] sm:$0xf]
    %v84 = vld [vmem:[%s0 + $0xc] sm:$0xf]
    %v85 = vld [vmem:[%s0 + $0x10] sm:$0xf]
    %v86 = vld [vmem:[%s0 + $0x14] sm:$0xf]
    %v87 = vld [vmem:[%s0 + $0x18] sm:$0xf]
    %v88 = vld [vmem:[%s0 + $0x1c] sm:$0x3]
    %v89 = vld [vmem:[#allocation6] sm:$0xf]
    %v90 = vld [vmem:[#allocation6 + $0x4] sm:$0xf]
    %v91 = vld [vmem:[#allocation6 + $0x8] sm:$0xf]
    %v92 = vld [vmem:[#allocation6 + $0xc] sm:$0xf]
    %v93 = vld [vmem:[#allocation6 + $0x10] sm:$0xf]
    %v94 = vld [vmem:[#allocation6 + $0x14] sm:$0xf]
    %v95 = vld [vmem:[#allocation6 + $0x18] sm:$0xf]
    %v96 = vld [vmem:[#allocation6 + $0x1c] sm:$0xf]
    %v97 = vld [vmem:[#allocation6 + $0x20] sm:$0xf]
    %v98 = vld [vmem:[#allocation6 + $0x24] sm:$0xf]
    %v99 = vld [vmem:[#allocation6 + $0x28] sm:$0xf]
    %v100 = vld [vmem:[#allocation6 + $0x2c] sm:$0xf]
    %v101 = vld [vmem:[#allocation6 + $0x30] sm:$0xf]
    %v102 = vld [vmem:[#allocation6 + $0x34] sm:$0xf]
    %v103 = vld [vmem:[#allocation6 + $0x38] sm:$0xf]
    %v104 = vld [vmem:[#allocation6 + $0x3c] sm:$0xf]
    %v113 = vunpack.c.l.b16 %v81
    %v114 = vunpack.c.l.b16 %v82
    %v115 = vunpack.c.l.b16 %v83
    %v116 = vunpack.c.l.b16 %v84
    %v117 = vunpack.c.l.b16 %v85
    %v118 = vunpack.c.l.b16 %v86
    %v119 = vunpack.c.l.b16 %v87
    %v120 = vunpack.c.l.b16 %v88
    %v121 = vpack.c.b16 %v114, %v113
    %v122 = vpack.c.b16 %v116, %v115
    %v123 = vpack.c.b16 %v118, %v117
    %v124 = vpack.c.b16 %v120, %v119
    %v145 = vunpack.c.l.b16 %v89
    %v146 = vunpack.c.l.b16 %v90
    %v147 = vunpack.c.l.b16 %v91
    %v148 = vunpack.c.l.b16 %v92
    %v149 = vunpack.c.l.b16 %v93
    %v150 = vunpack.c.l.b16 %v94
    %v151 = vunpack.c.l.b16 %v95
    %v152 = vunpack.c.l.b16 %v96
    %v153 = vunpack.c.l.b16 %v97
    %v154 = vunpack.c.l.b16 %v98
    %v155 = vunpack.c.l.b16 %v99
    %v156 = vunpack.c.l.b16 %v100
    %v157 = vunpack.c.l.b16 %v101
    %v158 = vunpack.c.l.b16 %v102
    %v159 = vunpack.c.l.b16 %v103
    %v160 = vunpack.c.l.b16 %v104
    %v161 = vpack.c.b16 %v146, %v145
    %v162 = vpack.c.b16 %v148, %v147
    %v163 = vpack.c.b16 %v150, %v149
    %v164 = vpack.c.b16 %v152, %v151
    %v165 = vpack.c.b16 %v154, %v153
    %v166 = vpack.c.b16 %v156, %v155
    %v167 = vpack.c.b16 %v158, %v157
    %v168 = vpack.c.b16 %v160, %v159
    %177 = vmatprep.subr.bf16.mxu0 0
    %178 = vmatpush1.bf16.msra.mxu0 %v168
    %179 = vmatprep.subr.bf16.mxu0 0
    %180 = vmatpush1.bf16.msra.mxu0 %v167
    %181 = vmatprep.subr.bf16.mxu0 0
    %182 = vmatpush1.bf16.msra.mxu0 %v166
    %183 = vmatprep.subr.bf16.mxu0 0
    %184 = vmatpush1.bf16.msra.mxu0 %v165
    %185 = vmatprep.subr.bf16.mxu0 0
    %186 = vmatpush1.bf16.msra.mxu0 %v164
    %187 = vmatprep.subr.bf16.mxu0 0
    %188 = vmatpush1.bf16.msra.mxu0 %v163
    %189 = vmatprep.subr.bf16.mxu0 0
    %190 = vmatpush1.bf16.msra.mxu0 %v162
    %191 = vmatprep.subr.bf16.mxu0 0
    %192 = vmatpush1.bf16.msra.mxu0 %v161
    %193 = vmatprep.subr.bf16.mxu0 0
    %194 = vmatpush2.bf16.msra.mxu0 0
    %195 = vmatprep.subr.bf16.mxu0 0
    %196 = vmatpush2.bf16.msra.mxu0 0
    %197 = vmatprep.subr.bf16.mxu0 0
    %198 = vmatpush2.bf16.msra.mxu0 0
    %199 = vmatprep.subr.bf16.mxu0 0
    %200 = vmatpush2.bf16.msra.mxu0 0
    %201 = vmatprep.subr.bf16.mxu0 0
    %202 = vmatpush2.bf16.msra.mxu0 0
    %203 = vmatprep.subr.bf16.mxu0 0
    %204 = vmatpush2.bf16.msra.mxu0 0
    %205 = vmatprep.subr.bf16.mxu0 0
    %206 = vmatpush2.bf16.msra.mxu0 0
    %207 = vmatprep.subr.bf16.mxu0 0
    %208 = vmatpush2.bf16.msra.mxu0 0
    %209 = vmatprep.mubr.bf16.mxu0 0
    %210 = vmatmul.mubr.bf16.gmra.mxu0 %v121
    %v211 = vpop.f32.mrf.mxu0
    %v212 = vadd.f32 0.0, %v211
    %v213 = vpop.f32.mrf.mxu0
    %v214 = vpop.f32.mrf.mxu0
    %v215 = vadd.f32 0.0, %v214
    %v216 = vpop.f32.mrf.mxu0
    %217 = vmatprep.mubr.bf16.mxu0 0
    %218 = vmatmul.mubr.bf16.gmra.mxu0 %v122
    %v219 = vpop.f32.mrf.mxu0
    %v220 = vadd.f32 0.0, %v219
    %v221 = vpop.f32.mrf.mxu0
    %v222 = vpop.f32.mrf.mxu0
    %v223 = vadd.f32 0.0, %v222
    %v224 = vpop.f32.mrf.mxu0
    %225 = vmatprep.mubr.bf16.mxu0 0
    %226 = vmatmul.mubr.bf16.gmra.mxu0 %v123
    %v227 = vpop.f32.mrf.mxu0
    %v228 = vadd.f32 0.0, %v227
    %v229 = vpop.f32.mrf.mxu0
    %v230 = vpop.f32.mrf.mxu0
    %v231 = vadd.f32 0.0, %v230
    %v232 = vpop.f32.mrf.mxu0
    %233 = vmatprep.mubr.bf16.mxu0 0
    %234 = vmatmul.mubr.bf16.gmra.mxu0 %v124
    %v235 = vpop.f32.mrf.mxu0
    %v236 = vadd.f32 0.0, %v235
    %v237 = vpop.f32.mrf.mxu0
    %v238 = vpop.f32.mrf.mxu0
    %v239 = vadd.f32 0.0, %v238
    %v240 = vpop.f32.mrf.mxu0
    %241 = vdwg.mxu0
    %s242 = scalar_lea.vmem [#allocation6], 64
    %v243 = vld [vmem:[%s242] sm:$0xf]
    %v244 = vld [vmem:[%s242 + $0x4] sm:$0xf]
    %v245 = vld [vmem:[%s242 + $0x8] sm:$0xf]
    %v246 = vld [vmem:[%s242 + $0xc] sm:$0xf]
    %v247 = vld [vmem:[%s242 + $0x10] sm:$0xf]
    %v248 = vld [vmem:[%s242 + $0x14] sm:$0xf]
    %v249 = vld [vmem:[%s242 + $0x18] sm:$0xf]
    %v250 = vld [vmem:[%s242 + $0x1c] sm:$0xf]
    %v251 = vld [vmem:[%s242 + $0x20] sm:$0xf]
    %v252 = vld [vmem:[%s242 + $0x24] sm:$0xf]
    %v253 = vld [vmem:[%s242 + $0x28] sm:$0xf]
    %v254 = vld [vmem:[%s242 + $0x2c] sm:$0xf]
    %v255 = vld [vmem:[%s242 + $0x30] sm:$0xf]
    %v256 = vld [vmem:[%s242 + $0x34] sm:$0xf]
    %v257 = vld [vmem:[%s242 + $0x38] sm:$0xf]
    %v258 = vld [vmem:[%s242 + $0x3c] sm:$0xf]
    %v275 = vunpack.c.l.b16 %v243
    %v276 = vunpack.c.l.b16 %v244
    %v277 = vunpack.c.l.b16 %v245
    %v278 = vunpack.c.l.b16 %v246
    %v279 = vunpack.c.l.b16 %v247
    %v280 = vunpack.c.l.b16 %v248
    %v281 = vunpack.c.l.b16 %v249
    %v282 = vunpack.c.l.b16 %v250
    %v283 = vunpack.c.l.b16 %v251
    %v284 = vunpack.c.l.b16 %v252
    %v285 = vunpack.c.l.b16 %v253
    %v286 = vunpack.c.l.b16 %v254
    %v287 = vunpack.c.l.b16 %v255
    %v288 = vunpack.c.l.b16 %v256
    %v289 = vunpack.c.l.b16 %v257
    %v290 = vunpack.c.l.b16 %v258
    %v291 = vpack.c.b16 %v276, %v275
    %v292 = vpack.c.b16 %v278, %v277
    %v293 = vpack.c.b16 %v280, %v279
    %v294 = vpack.c.b16 %v282, %v281
    %v295 = vpack.c.b16 %v284, %v283
    %v296 = vpack.c.b16 %v286, %v285
    %v297 = vpack.c.b16 %v288, %v287
    %v298 = vpack.c.b16 %v290, %v289
    %307 = vmatprep.subr.bf16.mxu0 0
    %308 = vmatpush1.bf16.msra.mxu0 %v298
    %309 = vmatprep.subr.bf16.mxu0 0
    %310 = vmatpush1.bf16.msra.mxu0 %v297
    %311 = vmatprep.subr.bf16.mxu0 0
    %312 = vmatpush1.bf16.msra.mxu0 %v296
    %313 = vmatprep.subr.bf16.mxu0 0
    %314 = vmatpush1.bf16.msra.mxu0 %v295
    %315 = vmatprep.subr.bf16.mxu0 0
    %316 = vmatpush1.bf16.msra.mxu0 %v294
    %317 = vmatprep.subr.bf16.mxu0 0
    %318 = vmatpush1.bf16.msra.mxu0 %v293
    %319 = vmatprep.subr.bf16.mxu0 0
    %320 = vmatpush1.bf16.msra.mxu0 %v292
    %321 = vmatprep.subr.bf16.mxu0 0
    %322 = vmatpush1.bf16.msra.mxu0 %v291
    %323 = vmatprep.subr.bf16.mxu0 0
    %324 = vmatpush2.bf16.msra.mxu0 0
    %325 = vmatprep.subr.bf16.mxu0 0
    %326 = vmatpush2.bf16.msra.mxu0 0
    %327 = vmatprep.subr.bf16.mxu0 0
    %328 = vmatpush2.bf16.msra.mxu0 0
    %329 = vmatprep.subr.bf16.mxu0 0
    %330 = vmatpush2.bf16.msra.mxu0 0
    %331 = vmatprep.subr.bf16.mxu0 0
    %332 = vmatpush2.bf16.msra.mxu0 0
    %333 = vmatprep.subr.bf16.mxu0 0
    %334 = vmatpush2.bf16.msra.mxu0 0
    %335 = vmatprep.subr.bf16.mxu0 0
    %336 = vmatpush2.bf16.msra.mxu0 0
    %337 = vmatprep.subr.bf16.mxu0 0
    %338 = vmatpush2.bf16.msra.mxu0 0
    %339 = vmatprep.mubr.bf16.mxu0 0
    %340 = vmatmul.mubr.bf16.gmra.mxu0 %v121
    %v341 = vpop.f32.mrf.mxu0
    %v342 = vadd.f32 0.0, %v341
    %v343 = vpop.f32.mrf.mxu0
    %v344 = vpop.f32.mrf.mxu0
    %v345 = vadd.f32 0.0, %v344
    %v346 = vpop.f32.mrf.mxu0
    %347 = vmatprep.mubr.bf16.mxu0 0
    %348 = vmatmul.mubr.bf16.gmra.mxu0 %v122
    %v349 = vpop.f32.mrf.mxu0
    %v350 = vadd.f32 0.0, %v349
    %v351 = vpop.f32.mrf.mxu0
    %v352 = vpop.f32.mrf.mxu0
    %v353 = vadd.f32 0.0, %v352
    %v354 = vpop.f32.mrf.mxu0
    %355 = vmatprep.mubr.bf16.mxu0 0
    %356 = vmatmul.mubr.bf16.gmra.mxu0 %v123
    %v357 = vpop.f32.mrf.mxu0
    %v358 = vadd.f32 0.0, %v357
    %v359 = vpop.f32.mrf.mxu0
    %v360 = vpop.f32.mrf.mxu0
    %v361 = vadd.f32 0.0, %v360
    %v362 = vpop.f32.mrf.mxu0
    %363 = vmatprep.mubr.bf16.mxu0 0
    %364 = vmatmul.mubr.bf16.gmra.mxu0 %v124
    %v365 = vpop.f32.mrf.mxu0
    %v366 = vadd.f32 0.0, %v365
    %v367 = vpop.f32.mrf.mxu0
    %v368 = vpop.f32.mrf.mxu0
    %v369 = vadd.f32 0.0, %v368
    %v370 = vpop.f32.mrf.mxu0
    %371 = vdwg.mxu0
    %v372 = vmax.f32 %v212, %v342
    %v373 = vmax.f32 %v215, %v345
    %v374 = vmax.f32 %v220, %v350
    %v375 = vmax.f32 %v223, %v353
    %v376 = vmax.f32 %v228, %v358
    %v377 = vmax.f32 %v231, %v361
    %v378 = vmax.f32 %v236, %v366
    %v379 = vmax.f32 %v239, %v369
    %v380 = vld [vmem:[%s2] sm:$0x1]
    %v382 = vlaneseq
    %v383 = vshrl.u32 %v382, 7
    %v384 = vsub.s32 0, %v383
    %v385 = vrot.slane %v380, %v384
    %v387 = vadd.f32 %v372, %v385
    %v388 = vadd.f32 %v373, %v385
    %v389 = vadd.f32 %v374, %v385
    %v390 = vadd.f32 %v375, %v385
    %v391 = vadd.f32 %v376, %v385
    %v392 = vadd.f32 %v377, %v385
    %v393 = vadd.f32 %v378, %v385
    %v394 = vadd.f32 %v379, %v385
    %v395 = vmax.f32 %v387, 0.0
    %v396 = vmax.f32 %v388, 0.0
    %v397 = vmax.f32 %v389, 0.0
    %v398 = vmax.f32 %v390, 0.0
    %v399 = vmax.f32 %v391, 0.0
    %v400 = vmax.f32 %v392, 0.0
    %v401 = vmax.f32 %v393, 0.0
    %v402 = vmax.f32 %v394, 0.0
    %403 = vst [vmem:[#allocation2] sm:$0xff] %v395
    %404 = vst [vmem:[#allocation2 + $0x8] sm:$0xff] %v396
    %405 = vst [vmem:[#allocation2 + $0x10] sm:$0xff] %v397
    %406 = vst [vmem:[#allocation2 + $0x18] sm:$0xff] %v398
    %407 = vst [vmem:[#allocation2 + $0x20] sm:$0xff] %v399
    %408 = vst [vmem:[#allocation2 + $0x28] sm:$0xff] %v400
    %409 = vst [vmem:[#allocation2 + $0x30] sm:$0xff] %v401
    %410 = vst [vmem:[#allocation2 + $0x38] sm:$0xf] %v402
    %v411 = vld [vmem:[#allocation2] ss:$2 sm:$0xff]
    %s412 = scalar_lea.vmem [#allocation2], 16
    %v413 = vld [vmem:[%s412] ss:$2 sm:$0xff]
    %s414 = scalar_lea.vmem [#allocation2], 32
    %v415 = vld [vmem:[%s414] ss:$2 sm:$0xff]
    %s416 = scalar_lea.vmem [#allocation2], 48
    %v417 = vld [vmem:[%s416] ss:$2 sm:$0x3f]
    %s418 = scalar_lea.vmem [#allocation2], 1
    %v419 = vld [vmem:[%s418] ss:$2 sm:$0xff]
    %s420 = scalar_lea.vmem [#allocation2], 17
    %v421 = vld [vmem:[%s420] ss:$2 sm:$0xff]
    %s422 = scalar_lea.vmem [#allocation2], 33
    %v423 = vld [vmem:[%s422] ss:$2 sm:$0xff]
    %s424 = scalar_lea.vmem [#allocation2], 49
    %v425 = vld [vmem:[%s424] ss:$2 sm:$0x3f]
    %v426 = vmax.f32 %v411, %v419
    %v427 = vmax.f32 %v413, %v421
    %v428 = vmax.f32 %v415, %v423
    %v429 = vmax.f32 %v417, %v425
    %430 = vst [vmem:[#allocation3] sm:$0xff] %v426
    %431 = vst [vmem:[#allocation3 + $0x8] sm:$0xff] %v427
    %432 = vst [vmem:[#allocation3 + $0x10] sm:$0xff] %v428
    %433 = vst [vmem:[#allocation3 + $0x18] sm:$0x3f] %v429
    %v434 = vld [vmem:[#allocation3] sm:$0xff]
    %v435 = vld [vmem:[#allocation3 + $0x8] sm:$0xff]
    %v436 = vld [vmem:[#allocation3 + $0x10] sm:$0xff]
    %v437 = vld [vmem:[#allocation3 + $0x18] sm:$0xf]
    %v438 = vld [vmem:[#allocation3 + $0x1] sm:$0xff]
    %v439 = vld [vmem:[#allocation3 + $0x9] sm:$0xff]
    %v440 = vld [vmem:[#allocation3 + $0x11] sm:$0xff]
    %v441 = vld [vmem:[#allocation3 + $0x19] sm:$0xf]
    %v442 = vld [vmem:[#allocation3 + $0x2] sm:$0xff]
    %v443 = vld [vmem:[#allocation3 + $0xa] sm:$0xff]
    %v444 = vld [vmem:[#allocation3 + $0x12] sm:$0xff]
    %v445 = vld [vmem:[#allocation3 + $0x1a] sm:$0xf]
    %v446 = vpack.c.bf16 %v435, %v434
    %v447 = vpack.c.bf16 %v439, %v438
    %v448 = vpack.c.bf16 %v443, %v442
    %v449 = vpack.c.bf16 %v437, %v436
    %v450 = vpack.c.bf16 %v441, %v440
    %v451 = vpack.c.bf16 %v445, %v444
    %v452 = vld [vmem:[%s3] sm:$0xf]
    %v453 = vld [vmem:[%s3 + $0x4] sm:$0xf]
    %v454 = vld [vmem:[%s3 + $0x8] sm:$0xf]
    %v455 = vld [vmem:[%s3 + $0xc] sm:$0xf]
    %v456 = vld [vmem:[%s3 + $0x10] sm:$0xf]
    %v457 = vld [vmem:[%s3 + $0x14] sm:$0xf]
    %v458 = vld [vmem:[%s3 + $0x18] sm:$0xf]
    %v459 = vld [vmem:[%s3 + $0x1c] sm:$0xf]
    %v460 = vld [vmem:[%s3 + $0x20] sm:$0xf]
    %v461 = vld [vmem:[%s3 + $0x24] sm:$0xf]
    %v462 = vld [vmem:[%s3 + $0x28] sm:$0xf]
    %v463 = vld [vmem:[%s3 + $0x2c] sm:$0xf]
    %v464 = vld [vmem:[%s3 + $0x30] sm:$0xf]
    %v465 = vld [vmem:[%s3 + $0x34] sm:$0xf]
    %v466 = vld [vmem:[%s3 + $0x38] sm:$0xf]
    %v467 = vld [vmem:[%s3 + $0x3c] sm:$0xf]
    %v468 = vld [vmem:[%s3 + $0x40] sm:$0xf]
    %v469 = vld [vmem:[%s3 + $0x44] sm:$0xf]
    %v470 = vld [vmem:[%s3 + $0x48] sm:$0xf]
    %v471 = vld [vmem:[%s3 + $0x4c] sm:$0xf]
    %v472 = vld [vmem:[%s3 + $0x50] sm:$0xf]
    %v473 = vld [vmem:[%s3 + $0x54] sm:$0xf]
    %v474 = vld [vmem:[%s3 + $0x58] sm:$0xf]
    %v475 = vld [vmem:[%s3 + $0x5c] sm:$0xf]
    %v476 = vld [vmem:[%s3 + $0x60] sm:$0xf]
    %v477 = vld [vmem:[%s3 + $0x64] sm:$0xf]
    %v478 = vld [vmem:[%s3 + $0x68] sm:$0xf]
    %v479 = vld [vmem:[%s3 + $0x6c] sm:$0xf]
    %v480 = vld [vmem:[%s3 + $0x70] sm:$0xf]
    %v481 = vld [vmem:[%s3 + $0x74] sm:$0xf]
    %v482 = vld [vmem:[%s3 + $0x78] sm:$0xf]
    %v483 = vld [vmem:[%s3 + $0x7c] sm:$0xf]
    %v484 = vld [vmem:[%s3 + $0x80] sm:$0xf]
    %v485 = vld [vmem:[%s3 + $0x84] sm:$0xf]
    %v486 = vld [vmem:[%s3 + $0x88] sm:$0xf]
    %v487 = vld [vmem:[%s3 + $0x8c] sm:$0xf]
    %v488 = vld [vmem:[%s3 + $0x90] sm:$0xf]
    %v489 = vld [vmem:[%s3 + $0x94] sm:$0xf]
    %v490 = vld [vmem:[%s3 + $0x98] sm:$0xf]
    %v491 = vld [vmem:[%s3 + $0x9c] sm:$0xf]
    %v492 = vld [vmem:[%s3 + $0xa0] sm:$0xf]
    %v493 = vld [vmem:[%s3 + $0xa4] sm:$0xf]
    %v494 = vld [vmem:[%s3 + $0xa8] sm:$0xf]
    %v495 = vld [vmem:[%s3 + $0xac] sm:$0xf]
    %v496 = vld [vmem:[%s3 + $0xb0] sm:$0xf]
    %v497 = vld [vmem:[%s3 + $0xb4] sm:$0xf]
    %v498 = vld [vmem:[%s3 + $0xb8] sm:$0xf]
    %v499 = vld [vmem:[%s3 + $0xbc] sm:$0xf]
    %v548 = vunpack.c.l.b16 %v452
    %v549 = vunpack.c.l.b16 %v453
    %v550 = vunpack.c.l.b16 %v454
    %v551 = vunpack.c.l.b16 %v455
    %v552 = vunpack.c.l.b16 %v456
    %v553 = vunpack.c.l.b16 %v457
    %v554 = vunpack.c.l.b16 %v458
    %v555 = vunpack.c.l.b16 %v459
    %v556 = vunpack.c.l.b16 %v460
    %v557 = vunpack.c.l.b16 %v461
    %v558 = vunpack.c.l.b16 %v462
    %v559 = vunpack.c.l.b16 %v463
    %v560 = vunpack.c.l.b16 %v464
    %v561 = vunpack.c.l.b16 %v465
    %v562 = vunpack.c.l.b16 %v466
    %v563 = vunpack.c.l.b16 %v467
    %v564 = vunpack.c.l.b16 %v468
    %v565 = vunpack.c.l.b16 %v469
    %v566 = vunpack.c.l.b16 %v470
    %v567 = vunpack.c.l.b16 %v471
    %v568 = vunpack.c.l.b16 %v472
    %v569 = vunpack.c.l.b16 %v473
    %v570 = vunpack.c.l.b16 %v474
    %v571 = vunpack.c.l.b16 %v475
    %v572 = vunpack.c.l.b16 %v476
    %v573 = vunpack.c.l.b16 %v477
    %v574 = vunpack.c.l.b16 %v478
    %v575 = vunpack.c.l.b16 %v479
    %v576 = vunpack.c.l.b16 %v480
    %v577 = vunpack.c.l.b16 %v481
    %v578 = vunpack.c.l.b16 %v482
    %v579 = vunpack.c.l.b16 %v483
    %v580 = vunpack.c.l.b16 %v484
    %v581 = vunpack.c.l.b16 %v485
    %v582 = vunpack.c.l.b16 %v486
    %v583 = vunpack.c.l.b16 %v487
    %v584 = vunpack.c.l.b16 %v488
    %v585 = vunpack.c.l.b16 %v489
    %v586 = vunpack.c.l.b16 %v490
    %v587 = vunpack.c.l.b16 %v491
    %v588 = vunpack.c.l.b16 %v492
    %v589 = vunpack.c.l.b16 %v493
    %v590 = vunpack.c.l.b16 %v494
    %v591 = vunpack.c.l.b16 %v495
    %v592 = vunpack.c.l.b16 %v496
    %v593 = vunpack.c.l.b16 %v497
    %v594 = vunpack.c.l.b16 %v498
    %v595 = vunpack.c.l.b16 %v499
    %v596 = vpack.c.b16 %v549, %v548
    %v597 = vpack.c.b16 %v551, %v550
    %v598 = vpack.c.b16 %v553, %v552
    %v599 = vpack.c.b16 %v555, %v554
    %v600 = vpack.c.b16 %v557, %v556
    %v601 = vpack.c.b16 %v559, %v558
    %v602 = vpack.c.b16 %v561, %v560
    %v603 = vpack.c.b16 %v563, %v562
    %v604 = vpack.c.b16 %v565, %v564
    %v605 = vpack.c.b16 %v567, %v566
    %v606 = vpack.c.b16 %v569, %v568
    %v607 = vpack.c.b16 %v571, %v570
    %v608 = vpack.c.b16 %v573, %v572
    %v609 = vpack.c.b16 %v575, %v574
    %v610 = vpack.c.b16 %v577, %v576
    %v611 = vpack.c.b16 %v579, %v578
    %v612 = vpack.c.b16 %v581, %v580
    %v613 = vpack.c.b16 %v583, %v582
    %v614 = vpack.c.b16 %v585, %v584
    %v615 = vpack.c.b16 %v587, %v586
    %v616 = vpack.c.b16 %v589, %v588
    %v617 = vpack.c.b16 %v591, %v590
    %v618 = vpack.c.b16 %v593, %v592
    %v619 = vpack.c.b16 %v595, %v594
    %644 = vmatprep.subr.bf16.mxu0 0
    %645 = vmatpush1.bf16.msra.mxu0 %v603
    %646 = vmatprep.subr.bf16.mxu0 0
    %647 = vmatpush1.bf16.msra.mxu0 %v602
    %648 = vmatprep.subr.bf16.mxu0 0
    %649 = vmatpush1.bf16.msra.mxu0 %v601
    %650 = vmatprep.subr.bf16.mxu0 0
    %651 = vmatpush1.bf16.msra.mxu0 %v600
    %652 = vmatprep.subr.bf16.mxu0 0
    %653 = vmatpush1.bf16.msra.mxu0 %v599
    %654 = vmatprep.subr.bf16.mxu0 0
    %655 = vmatpush1.bf16.msra.mxu0 %v598
    %656 = vmatprep.subr.bf16.mxu0 0
    %657 = vmatpush1.bf16.msra.mxu0 %v597
    %658 = vmatprep.subr.bf16.mxu0 0
    %659 = vmatpush1.bf16.msra.mxu0 %v596
    %660 = vmatprep.subr.bf16.mxu0 0
    %661 = vmatpush2.bf16.msra.mxu0 %v611
    %662 = vmatprep.subr.bf16.mxu0 0
    %663 = vmatpush2.bf16.msra.mxu0 %v610
    %664 = vmatprep.subr.bf16.mxu0 0
    %665 = vmatpush2.bf16.msra.mxu0 %v609
    %666 = vmatprep.subr.bf16.mxu0 0
    %667 = vmatpush2.bf16.msra.mxu0 %v608
    %668 = vmatprep.subr.bf16.mxu0 0
    %669 = vmatpush2.bf16.msra.mxu0 %v607
    %670 = vmatprep.subr.bf16.mxu0 0
    %671 = vmatpush2.bf16.msra.mxu0 %v606
    %672 = vmatprep.subr.bf16.mxu0 0
    %673 = vmatpush2.bf16.msra.mxu0 %v605
    %674 = vmatprep.subr.bf16.mxu0 0
    %675 = vmatpush2.bf16.msra.mxu0 %v604
    %676 = vmatprep.mubr.bf16.mxu0 %v447
    %677 = vmatmul.mubr.bf16.gmra.mxu0 %v446
    %v678 = vpop.f32.mrf.mxu0
    %v679 = vadd.f32 0.0, %v678
    %v680 = vpop.f32.mrf.mxu0
    %v681 = vpop.f32.mrf.mxu0
    %v682 = vadd.f32 0.0, %v681
    %v683 = vpop.f32.mrf.mxu0
    %684 = vmatprep.mubr.bf16.mxu0 %v450
    %685 = vmatmul.mubr.bf16.gmra.mxu0 %v449
    %v686 = vpop.f32.mrf.mxu0
    %v687 = vadd.f32 0.0, %v686
    %v688 = vpop.f32.mrf.mxu0
    %v689 = vpop.f32.mrf.mxu0
    %v690 = vadd.f32 0.0, %v689
    %v691 = vpop.f32.mrf.mxu0
    %692 = vdwg.mxu0
    %693 = vmatprep.subr.bf16.mxu0 0
    %694 = vmatpush1.bf16.msra.mxu0 %v619
    %695 = vmatprep.subr.bf16.mxu0 0
    %696 = vmatpush1.bf16.msra.mxu0 %v618
    %697 = vmatprep.subr.bf16.mxu0 0
    %698 = vmatpush1.bf16.msra.mxu0 %v617
    %699 = vmatprep.subr.bf16.mxu0 0
    %700 = vmatpush1.bf16.msra.mxu0 %v616
    %701 = vmatprep.subr.bf16.mxu0 0
    %702 = vmatpush1.bf16.msra.mxu0 %v615
    %703 = vmatprep.subr.bf16.mxu0 0
    %704 = vmatpush1.bf16.msra.mxu0 %v614
    %705 = vmatprep.subr.bf16.mxu0 0
    %706 = vmatpush1.bf16.msra.mxu0 %v613
    %707 = vmatprep.subr.bf16.mxu0 0
    %708 = vmatpush1.bf16.msra.mxu0 %v612
    %709 = vmatprep.subr.bf16.mxu0 0
    %710 = vmatpush2.bf16.msra.mxu0 0
    %711 = vmatprep.subr.bf16.mxu0 0
    %712 = vmatpush2.bf16.msra.mxu0 0
    %713 = vmatprep.subr.bf16.mxu0 0
    %714 = vmatpush2.bf16.msra.mxu0 0
    %715 = vmatprep.subr.bf16.mxu0 0
    %716 = vmatpush2.bf16.msra.mxu0 0
    %717 = vmatprep.subr.bf16.mxu0 0
    %718 = vmatpush2.bf16.msra.mxu0 0
    %719 = vmatprep.subr.bf16.mxu0 0
    %720 = vmatpush2.bf16.msra.mxu0 0
    %721 = vmatprep.subr.bf16.mxu0 0
    %722 = vmatpush2.bf16.msra.mxu0 0
    %723 = vmatprep.subr.bf16.mxu0 0
    %724 = vmatpush2.bf16.msra.mxu0 0
    %725 = vmatprep.mubr.bf16.mxu0 0
    %726 = vmatmul.mubr.bf16.gmra.mxu0 %v448
    %v727 = vpop.f32.mrf.mxu0
    %v728 = vadd.f32 %v679, %v727
    %v729 = vpop.f32.mrf.mxu0
    %v730 = vpop.f32.mrf.mxu0
    %v731 = vadd.f32 %v682, %v730
    %v732 = vpop.f32.mrf.mxu0
    %733 = vmatprep.mubr.bf16.mxu0 0
    %734 = vmatmul.mubr.bf16.gmra.mxu0 %v451
    %v735 = vpop.f32.mrf.mxu0
    %v736 = vadd.f32 %v687, %v735
    %v737 = vpop.f32.mrf.mxu0
    %v738 = vpop.f32.mrf.mxu0
    %v739 = vadd.f32 %v690, %v738
    %v740 = vpop.f32.mrf.mxu0
    %741 = vdwg.mxu0
    %s742 = scalar_lea.vmem %s3, 192
    %v743 = vld [vmem:[%s742] sm:$0xf]
    %v744 = vld [vmem:[%s742 + $0x4] sm:$0xf]
    %v745 = vld [vmem:[%s742 + $0x8] sm:$0xf]
    %v746 = vld [vmem:[%s742 + $0xc] sm:$0xf]
    %v747 = vld [vmem:[%s742 + $0x10] sm:$0xf]
    %v748 = vld [vmem:[%s742 + $0x14] sm:$0xf]
    %v749 = vld [vmem:[%s742 + $0x18] sm:$0xf]
    %v750 = vld [vmem:[%s742 + $0x1c] sm:$0xf]
    %v751 = vld [vmem:[%s742 + $0x20] sm:$0xf]
    %v752 = vld [vmem:[%s742 + $0x24] sm:$0xf]
    %v753 = vld [vmem:[%s742 + $0x28] sm:$0xf]
    %v754 = vld [vmem:[%s742 + $0x2c] sm:$0xf]
    %v755 = vld [vmem:[%s742 + $0x30] sm:$0xf]
    %v756 = vld [vmem:[%s742 + $0x34] sm:$0xf]
    %v757 = vld [vmem:[%s742 + $0x38] sm:$0xf]
    %v758 = vld [vmem:[%s742 + $0x3c] sm:$0xf]
    %v759 = vld [vmem:[%s742 + $0x40] sm:$0xf]
    %v760 = vld [vmem:[%s742 + $0x44] sm:$0xf]
    %v761 = vld [vmem:[%s742 + $0x48] sm:$0xf]
    %v762 = vld [vmem:[%s742 + $0x4c] sm:$0xf]
    %v763 = vld [vmem:[%s742 + $0x50] sm:$0xf]
    %v764 = vld [vmem:[%s742 + $0x54] sm:$0xf]
    %v765 = vld [vmem:[%s742 + $0x58] sm:$0xf]
    %v766 = vld [vmem:[%s742 + $0x5c] sm:$0xf]
    %v767 = vld [vmem:[%s742 + $0x60] sm:$0xf]
    %v768 = vld [vmem:[%s742 + $0x64] sm:$0xf]
    %v769 = vld [vmem:[%s742 + $0x68] sm:$0xf]
    %v770 = vld [vmem:[%s742 + $0x6c] sm:$0xf]
    %v771 = vld [vmem:[%s742 + $0x70] sm:$0xf]
    %v772 = vld [vmem:[%s742 + $0x74] sm:$0xf]
    %v773 = vld [vmem:[%s742 + $0x78] sm:$0xf]
    %v774 = vld [vmem:[%s742 + $0x7c] sm:$0xf]
    %v775 = vld [vmem:[%s742 + $0x80] sm:$0xf]
    %v776 = vld [vmem:[%s742 + $0x84] sm:$0xf]
    %v777 = vld [vmem:[%s742 + $0x88] sm:$0xf]
    %v778 = vld [vmem:[%s742 + $0x8c] sm:$0xf]
    %v779 = vld [vmem:[%s742 + $0x90] sm:$0xf]
    %v780 = vld [vmem:[%s742 + $0x94] sm:$0xf]
    %v781 = vld [vmem:[%s742 + $0x98] sm:$0xf]
    %v782 = vld [vmem:[%s742 + $0x9c] sm:$0xf]
    %v783 = vld [vmem:[%s742 + $0xa0] sm:$0xf]
    %v784 = vld [vmem:[%s742 + $0xa4] sm:$0xf]
    %v785 = vld [vmem:[%s742 + $0xa8] sm:$0xf]
    %v786 = vld [vmem:[%s742 + $0xac] sm:$0xf]
    %v787 = vld [vmem:[%s742 + $0xb0] sm:$0xf]
    %v788 = vld [vmem:[%s742 + $0xb4] sm:$0xf]
    %v789 = vld [vmem:[%s742 + $0xb8] sm:$0xf]
    %v790 = vld [vmem:[%s742 + $0xbc] sm:$0xf]
    %v839 = vunpack.c.l.b16 %v743
    %v840 = vunpack.c.l.b16 %v744
    %v841 = vunpack.c.l.b16 %v745
    %v842 = vunpack.c.l.b16 %v746
    %v843 = vunpack.c.l.b16 %v747
    %v844 = vunpack.c.l.b16 %v748
    %v845 = vunpack.c.l.b16 %v749
    %v846 = vunpack.c.l.b16 %v750
    %v847 = vunpack.c.l.b16 %v751
    %v848 = vunpack.c.l.b16 %v752
    %v849 = vunpack.c.l.b16 %v753
    %v850 = vunpack.c.l.b16 %v754
    %v851 = vunpack.c.l.b16 %v755
    %v852 = vunpack.c.l.b16 %v756
    %v853 = vunpack.c.l.b16 %v757
    %v854 = vunpack.c.l.b16 %v758
    %v855 = vunpack.c.l.b16 %v759
    %v856 = vunpack.c.l.b16 %v760
    %v857 = vunpack.c.l.b16 %v761
    %v858 = vunpack.c.l.b16 %v762
    %v859 = vunpack.c.l.b16 %v763
    %v860 = vunpack.c.l.b16 %v764
    %v861 = vunpack.c.l.b16 %v765
    %v862 = vunpack.c.l.b16 %v766
    %v863 = vunpack.c.l.b16 %v767
    %v864 = vunpack.c.l.b16 %v768
    %v865 = vunpack.c.l.b16 %v769
    %v866 = vunpack.c.l.b16 %v770
    %v867 = vunpack.c.l.b16 %v771
    %v868 = vunpack.c.l.b16 %v772
    %v869 = vunpack.c.l.b16 %v773
    %v870 = vunpack.c.l.b16 %v774
    %v871 = vunpack.c.l.b16 %v775
    %v872 = vunpack.c.l.b16 %v776
    %v873 = vunpack.c.l.b16 %v777
    %v874 = vunpack.c.l.b16 %v778
    %v875 = vunpack.c.l.b16 %v779
    %v876 = vunpack.c.l.b16 %v780
    %v877 = vunpack.c.l.b16 %v781
    %v878 = vunpack.c.l.b16 %v782
    %v879 = vunpack.c.l.b16 %v783
    %v880 = vunpack.c.l.b16 %v784
    %v881 = vunpack.c.l.b16 %v785
    %v882 = vunpack.c.l.b16 %v786
    %v883 = vunpack.c.l.b16 %v787
    %v884 = vunpack.c.l.b16 %v788
    %v885 = vunpack.c.l.b16 %v789
    %v886 = vunpack.c.l.b16 %v790
    %v887 = vpack.c.b16 %v840, %v839
    %v888 = vpack.c.b16 %v842, %v841
    %v889 = vpack.c.b16 %v844, %v843
    %v890 = vpack.c.b16 %v846, %v845
    %v891 = vpack.c.b16 %v848, %v847
    %v892 = vpack.c.b16 %v850, %v849
    %v893 = vpack.c.b16 %v852, %v851
    %v894 = vpack.c.b16 %v854, %v853
    %v895 = vpack.c.b16 %v856, %v855
    %v896 = vpack.c.b16 %v858, %v857
    %v897 = vpack.c.b16 %v860, %v859
    %v898 = vpack.c.b16 %v862, %v861
    %v899 = vpack.c.b16 %v864, %v863
    %v900 = vpack.c.b16 %v866, %v865
    %v901 = vpack.c.b16 %v868, %v867
    %v902 = vpack.c.b16 %v870, %v869
    %v903 = vpack.c.b16 %v872, %v871
    %v904 = vpack.c.b16 %v874, %v873
    %v905 = vpack.c.b16 %v876, %v875
    %v906 = vpack.c.b16 %v878, %v877
    %v907 = vpack.c.b16 %v880, %v879
    %v908 = vpack.c.b16 %v882, %v881
    %v909 = vpack.c.b16 %v884, %v883
    %v910 = vpack.c.b16 %v886, %v885
    %935 = vmatprep.subr.bf16.mxu0 0
    %936 = vmatpush1.bf16.msra.mxu0 %v894
    %937 = vmatprep.subr.bf16.mxu0 0
    %938 = vmatpush1.bf16.msra.mxu0 %v893
    %939 = vmatprep.subr.bf16.mxu0 0
    %940 = vmatpush1.bf16.msra.mxu0 %v892
    %941 = vmatprep.subr.bf16.mxu0 0
    %942 = vmatpush1.bf16.msra.mxu0 %v891
    %943 = vmatprep.subr.bf16.mxu0 0
    %944 = vmatpush1.bf16.msra.mxu0 %v890
    %945 = vmatprep.subr.bf16.mxu0 0
    %946 = vmatpush1.bf16.msra.mxu0 %v889
    %947 = vmatprep.subr.bf16.mxu0 0
    %948 = vmatpush1.bf16.msra.mxu0 %v888
    %949 = vmatprep.subr.bf16.mxu0 0
    %950 = vmatpush1.bf16.msra.mxu0 %v887
    %951 = vmatprep.subr.bf16.mxu0 0
    %952 = vmatpush2.bf16.msra.mxu0 %v902
    %953 = vmatprep.subr.bf16.mxu0 0
    %954 = vmatpush2.bf16.msra.mxu0 %v901
    %955 = vmatprep.subr.bf16.mxu0 0
    %956 = vmatpush2.bf16.msra.mxu0 %v900
    %957 = vmatprep.subr.bf16.mxu0 0
    %958 = vmatpush2.bf16.msra.mxu0 %v899
    %959 = vmatprep.subr.bf16.mxu0 0
    %960 = vmatpush2.bf16.msra.mxu0 %v898
    %961 = vmatprep.subr.bf16.mxu0 0
    %962 = vmatpush2.bf16.msra.mxu0 %v897
    %963 = vmatprep.subr.bf16.mxu0 0
    %964 = vmatpush2.bf16.msra.mxu0 %v896
    %965 = vmatprep.subr.bf16.mxu0 0
    %966 = vmatpush2.bf16.msra.mxu0 %v895
    %967 = vmatprep.mubr.bf16.mxu0 %v447
    %968 = vmatmul.mubr.bf16.gmra.mxu0 %v446
    %v969 = vpop.f32.mrf.mxu0
    %v970 = vadd.f32 0.0, %v969
    %v971 = vpop.f32.mrf.mxu0
    %v972 = vpop.f32.mrf.mxu0
    %v973 = vadd.f32 0.0, %v972
    %v974 = vpop.f32.mrf.mxu0
    %975 = vmatprep.mubr.bf16.mxu0 %v450
    %976 = vmatmul.mubr.bf16.gmra.mxu0 %v449
    %v977 = vpop.f32.mrf.mxu0
    %v978 = vadd.f32 0.0, %v977
    %v979 = vpop.f32.mrf.mxu0
    %v980 = vpop.f32.mrf.mxu0
    %v981 = vadd.f32 0.0, %v980
    %v982 = vpop.f32.mrf.mxu0
    %983 = vdwg.mxu0
    %984 = vmatprep.subr.bf16.mxu0 0
    %985 = vmatpush1.bf16.msra.mxu0 %v910
    %986 = vmatprep.subr.bf16.mxu0 0
    %987 = vmatpush1.bf16.msra.mxu0 %v909
    %988 = vmatprep.subr.bf16.mxu0 0
    %989 = vmatpush1.bf16.msra.mxu0 %v908
    %990 = vmatprep.subr.bf16.mxu0 0
    %991 = vmatpush1.bf16.msra.mxu0 %v907
    %992 = vmatprep.subr.bf16.mxu0 0
    %993 = vmatpush1.bf16.msra.mxu0 %v906
    %994 = vmatprep.subr.bf16.mxu0 0
    %995 = vmatpush1.bf16.msra.mxu0 %v905
    %996 = vmatprep.subr.bf16.mxu0 0
    %997 = vmatpush1.bf16.msra.mxu0 %v904
    %998 = vmatprep.subr.bf16.mxu0 0
    %999 = vmatpush1.bf16.msra.mxu0 %v903
    %1000 = vmatprep.subr.bf16.mxu0 0
    %1001 = vmatpush2.bf16.msra.mxu0 0
    %1002 = vmatprep.subr.bf16.mxu0 0
    %1003 = vmatpush2.bf16.msra.mxu0 0
    %1004 = vmatprep.subr.bf16.mxu0 0
    %1005 = vmatpush2.bf16.msra.mxu0 0
    %1006 = vmatprep.subr.bf16.mxu0 0
    %1007 = vmatpush2.bf16.msra.mxu0 0
    %1008 = vmatprep.subr.bf16.mxu0 0
    %1009 = vmatpush2.bf16.msra.mxu0 0
    %1010 = vmatprep.subr.bf16.mxu0 0
    %1011 = vmatpush2.bf16.msra.mxu0 0
    %1012 = vmatprep.subr.bf16.mxu0 0
    %1013 = vmatpush2.bf16.msra.mxu0 0
    %1014 = vmatprep.subr.bf16.mxu0 0
    %1015 = vmatpush2.bf16.msra.mxu0 0
    %1016 = vmatprep.mubr.bf16.mxu0 0
    %1017 = vmatmul.mubr.bf16.gmra.mxu0 %v448
    %v1018 = vpop.f32.mrf.mxu0
    %v1019 = vadd.f32 %v970, %v1018
    %v1020 = vpop.f32.mrf.mxu0
    %v1021 = vpop.f32.mrf.mxu0
    %v1022 = vadd.f32 %v973, %v1021
    %v1023 = vpop.f32.mrf.mxu0
    %1024 = vmatprep.mubr.bf16.mxu0 0
    %1025 = vmatmul.mubr.bf16.gmra.mxu0 %v451
    %v1026 = vpop.f32.mrf.mxu0
    %v1027 = vadd.f32 %v978, %v1026
    %v1028 = vpop.f32.mrf.mxu0
    %v1029 = vpop.f32.mrf.mxu0
    %v1030 = vadd.f32 %v981, %v1029
    %v1031 = vpop.f32.mrf.mxu0
    %1032 = vdwg.mxu0
    %v1033 = vmax.f32 %v728, %v1019
    %v1034 = vmax.f32 %v731, %v1022
    %v1035 = vmax.f32 %v736, %v1027
    %v1036 = vmax.f32 %v739, %v1030
    %v1037 = vld [vmem:[%s4] sm:$0x1]
    %v1039 = vlaneseq
    %v1040 = vshrl.u32 %v1039, 7
    %v1041 = vsub.s32 0, %v1040
    %v1042 = vrot.slane %v1037, %v1041
    %v1044 = vadd.f32 %v1033, %v1042
    %v1045 = vadd.f32 %v1034, %v1042
    %v1046 = vadd.f32 %v1035, %v1042
    %v1047 = vadd.f32 %v1036, %v1042
    %v1048 = vmax.f32 %v1044, 0.0
    %v1049 = vmax.f32 %v1045, 0.0
    %v1050 = vmax.f32 %v1046, 0.0
    %v1051 = vmax.f32 %v1047, 0.0
    %1052 = vst [vmem:[#allocation4] sm:$0xff] %v1048
    %1053 = vst [vmem:[#allocation4 + $0x8] sm:$0xff] %v1049
    %1054 = vst [vmem:[#allocation4 + $0x10] sm:$0xff] %v1050
    %1055 = vst [vmem:[#allocation4 + $0x18] sm:$0xf] %v1051
    %v1056 = vld [vmem:[#allocation4] sm:$0x1]
    %v1057 = vld [vmem:[#allocation4 + $0x1] sm:$0x1]
    %v1058 = vmax.f32 %v1056, %v1057
    %v1059 = vld [vmem:[#allocation4 + $0x2] sm:$0x1]
    %v1060 = vld [vmem:[#allocation4 + $0x3] sm:$0x1]
    %v1061 = vmax.f32 %v1059, %v1060
    %v1062 = vld [vmem:[#allocation4 + $0x4] sm:$0x1]
    %v1063 = vld [vmem:[#allocation4 + $0x5] sm:$0x1]
    %v1064 = vmax.f32 %v1062, %v1063
    %v1065 = vld [vmem:[#allocation4 + $0x6] sm:$0x1]
    %v1066 = vld [vmem:[#allocation4 + $0x7] sm:$0x1]
    %v1067 = vmax.f32 %v1065, %v1066
    %v1068 = vld [vmem:[#allocation4 + $0x8] sm:$0x1]
    %v1069 = vld [vmem:[#allocation4 + $0x9] sm:$0x1]
    %v1070 = vmax.f32 %v1068, %v1069
    %v1071 = vld [vmem:[#allocation4 + $0xa] sm:$0x1]
    %v1072 = vld [vmem:[#allocation4 + $0xb] sm:$0x1]
    %v1073 = vmax.f32 %v1071, %v1072
    %v1080 = vcombine.low %v1058, %v1061
    %v1081 = vcombine.low %v1064, %v1067
    %v1082 = vcombine.low %v1070, %v1073
    %v1084 = vunpack.c.l.s4 1966171168
    %v1085 = vunpack.c.0.s8 %v1084
    %v1086 = vlaneseq
    %v1087 = vshrl.u32 %v1086, 7
    %v1088 = vsub.s32 %v1085, %v1087
    %v1089 = vrot.slane %v1080, %v1088
    %v1091 = vunpack.c.l.s4 1966171168
    %v1092 = vunpack.c.0.s8 %v1091
    %v1093 = vlaneseq
    %v1094 = vshrl.u32 %v1093, 7
    %v1095 = vsub.s32 %v1092, %v1094
    %v1096 = vrot.slane %v1081, %v1095
    %v1098 = vunpack.c.l.s4 1966171168
    %v1099 = vunpack.c.0.s8 %v1098
    %v1100 = vlaneseq
    %v1101 = vshrl.u32 %v1100, 7
    %v1102 = vsub.s32 %v1099, %v1101
    %v1103 = vrot.slane %v1082, %v1102
    %v1104 = vcombine.low %v1089, %v1096
    %v1106 = vunpack.c.l.s4 1966171168
    %v1107 = vunpack.c.0.s8 %v1106
    %v1108 = vlaneseq
    %v1109 = vshrl.u32 %v1108, 7
    %v1110 = vsub.s32 %v1107, %v1109
    %v1111 = vrot.slane %v1104, %v1110
    %v1113 = vunpack.c.l.s4 1966171168
    %v1114 = vunpack.c.0.s8 %v1113
    %v1115 = vlaneseq
    %v1116 = vshrl.u32 %v1115, 7
    %v1117 = vsub.s32 %v1114, %v1116
    %v1118 = vrot.slane %v1103, %v1117
    %v1119 = vcombine.low %v1111, %v1118
    %v1121 = vlaneseq
    %vm1122 = vcmp.ge.s32.totalorder %v1121, 0
    %vm1123 = vcmp.lt.s32.totalorder %v1121, 768
    %vm1124 = vmand %vm1122, %vm1123
    %1125 = vst.msk [vmem:[#allocation5] ss:$2 sm:$0x3f] %vm1124, %v1119
    %v1126 = vld [vmem:[#allocation4 + $0xf] sm:$0x1]
    %v1127 = vld [vmem:[#allocation4 + $0x10] sm:$0x1]
    %v1128 = vmax.f32 %v1126, %v1127
    %v1129 = vld [vmem:[#allocation4 + $0x11] sm:$0x1]
    %v1130 = vld [vmem:[#allocation4 + $0x12] sm:$0x1]
    %v1131 = vmax.f32 %v1129, %v1130
    %v1132 = vld [vmem:[#allocation4 + $0x13] sm:$0x1]
    %v1133 = vld [vmem:[#allocation4 + $0x14] sm:$0x1]
    %v1134 = vmax.f32 %v1132, %v1133
    %v1135 = vld [vmem:[#allocation4 + $0x15] sm:$0x1]
    %v1136 = vld [vmem:[#allocation4 + $0x16] sm:$0x1]
    %v1137 = vmax.f32 %v1135, %v1136
    %v1138 = vld [vmem:[#allocation4 + $0x17] sm:$0x1]
    %v1139 = vld [vmem:[#allocation4 + $0x18] sm:$0x1]
    %v1140 = vmax.f32 %v1138, %v1139
    %v1141 = vld [vmem:[#allocation4 + $0x19] sm:$0x1]
    %v1142 = vld [vmem:[#allocation4 + $0x1a] sm:$0x1]
    %v1143 = vmax.f32 %v1141, %v1142
    %v1150 = vcombine.low %v1128, %v1131
    %v1151 = vcombine.low %v1134, %v1137
    %v1152 = vcombine.low %v1140, %v1143
    %v1154 = vunpack.c.l.s4 1966171168
    %v1155 = vunpack.c.0.s8 %v1154
    %v1156 = vlaneseq
    %v1157 = vshrl.u32 %v1156, 7
    %v1158 = vsub.s32 %v1155, %v1157
    %v1159 = vrot.slane %v1150, %v1158
    %v1161 = vunpack.c.l.s4 1966171168
    %v1162 = vunpack.c.0.s8 %v1161
    %v1163 = vlaneseq
    %v1164 = vshrl.u32 %v1163, 7
    %v1165 = vsub.s32 %v1162, %v1164
    %v1166 = vrot.slane %v1151, %v1165
    %v1168 = vunpack.c.l.s4 1966171168
    %v1169 = vunpack.c.0.s8 %v1168
    %v1170 = vlaneseq
    %v1171 = vshrl.u32 %v1170, 7
    %v1172 = vsub.s32 %v1169, %v1171
    %v1173 = vrot.slane %v1152, %v1172
    %v1174 = vcombine.low %v1159, %v1166
    %v1176 = vunpack.c.l.s4 1966171168
    %v1177 = vunpack.c.0.s8 %v1176
    %v1178 = vlaneseq
    %v1179 = vshrl.u32 %v1178, 7
    %v1180 = vsub.s32 %v1177, %v1179
    %v1181 = vrot.slane %v1174, %v1180
    %v1183 = vunpack.c.l.s4 1966171168
    %v1184 = vunpack.c.0.s8 %v1183
    %v1185 = vlaneseq
    %v1186 = vshrl.u32 %v1185, 7
    %v1187 = vsub.s32 %v1184, %v1186
    %v1188 = vrot.slane %v1173, %v1187
    %v1189 = vcombine.low %v1181, %v1188
    %s1191 = scalar_lea.vmem [#allocation5], 1
    %1192 = vst.msk [vmem:[%s1191] ss:$2 sm:$0x3f] %vm1124, %v1189
    %v1193 = vld [vmem:[#allocation5] sm:$0xff]
    %v1194 = vld [vmem:[#allocation5 + $0x8] sm:$0xf]
    %v1197 = vcombine.high %v1193, %v1193
    %v1199 = vunpack.c.l.s4 1983009808
    %v1200 = vunpack.c.0.s8 %v1199
    %v1201 = vlaneseq
    %v1202 = vshrl.u32 %v1201, 7
    %v1203 = vsub.s32 %v1200, %v1202
    %v1204 = vrot.slane %v1193, %v1203
    %v1206 = vunpack.c.l.s4 1983009808
    %v1207 = vunpack.c.0.s8 %v1206
    %v1208 = vlaneseq
    %v1209 = vshrl.u32 %v1208, 7
    %v1210 = vsub.s32 %v1207, %v1209
    %v1211 = vrot.slane %v1197, %v1210
    %v1212 = vcombine.high %v1204, %v1204
    %v1213 = vcombine.high %v1211, %v1211
    %v1215 = vunpack.c.l.s4 1983009808
    %v1216 = vunpack.c.0.s8 %v1215
    %v1217 = vlaneseq
    %v1218 = vshrl.u32 %v1217, 7
    %v1219 = vsub.s32 %v1216, %v1218
    %v1220 = vrot.slane %v1194, %v1219
    %v1221 = vcombine.high %v1220, %v1220
    %v1228 = vpack.c.bf16 %v1204, %v1204
    %v1229 = vpack.c.bf16 %v1212, %v1212
    %v1230 = vpack.c.bf16 %v1211, %v1211
    %v1231 = vpack.c.bf16 %v1213, %v1213
    %v1232 = vpack.c.bf16 %v1220, %v1220
    %v1233 = vpack.c.bf16 %v1221, %v1221
    %v1234 = vld [vmem:[#allocation9] sm:$0xf]
    %v1235 = vld [vmem:[#allocation9 + $0x4] sm:$0xf]
    %v1236 = vld [vmem:[#allocation9 + $0x8] sm:$0xf]
    %v1237 = vld [vmem:[#allocation9 + $0xc] sm:$0xf]
    %v1238 = vld [vmem:[#allocation9 + $0x10] sm:$0xf]
    %v1239 = vld [vmem:[#allocation9 + $0x14] sm:$0xf]
    %v1240 = vld [vmem:[#allocation9 + $0x18] sm:$0xf]
    %v1241 = vld [vmem:[#allocation9 + $0x1c] sm:$0xf]
    %v1242 = vld [vmem:[#allocation9 + $0x20] sm:$0xf]
    %v1243 = vld [vmem:[#allocation9 + $0x24] sm:$0xf]
    %v1244 = vld [vmem:[#allocation9 + $0x28] sm:$0xf]
    %v1245 = vld [vmem:[#allocation9 + $0x2c] sm:$0xf]
    %v1246 = vld [vmem:[#allocation9 + $0x30] sm:$0xf]
    %v1247 = vld [vmem:[#allocation9 + $0x34] sm:$0xf]
    %v1248 = vld [vmem:[#allocation9 + $0x38] sm:$0xf]
    %v1249 = vld [vmem:[#allocation9 + $0x3c] sm:$0xf]
    %v1250 = vld [vmem:[#allocation9 + $0x40] sm:$0xf]
    %v1251 = vld [vmem:[#allocation9 + $0x44] sm:$0xf]
    %v1252 = vld [vmem:[#allocation9 + $0x48] sm:$0xf]
    %v1253 = vld [vmem:[#allocation9 + $0x4c] sm:$0xf]
    %v1254 = vld [vmem:[#allocation9 + $0x50] sm:$0xf]
    %v1255 = vld [vmem:[#allocation9 + $0x54] sm:$0xf]
    %v1256 = vld [vmem:[#allocation9 + $0x58] sm:$0xf]
    %v1257 = vld [vmem:[#allocation9 + $0x5c] sm:$0xf]
    %v1258 = vld [vmem:[#allocation9 + $0x60] sm:$0xf]
    %v1259 = vld [vmem:[#allocation9 + $0x64] sm:$0xf]
    %v1260 = vld [vmem:[#allocation9 + $0x68] sm:$0xf]
    %v1261 = vld [vmem:[#allocation9 + $0x6c] sm:$0xf]
    %v1262 = vld [vmem:[#allocation9 + $0x70] sm:$0xf]
    %v1263 = vld [vmem:[#allocation9 + $0x74] sm:$0xf]
    %v1264 = vld [vmem:[#allocation9 + $0x78] sm:$0xf]
    %v1265 = vld [vmem:[#allocation9 + $0x7c] sm:$0xf]
    %v1266 = vld [vmem:[#allocation9 + $0x80] sm:$0xf]
    %v1267 = vld [vmem:[#allocation9 + $0x84] sm:$0xf]
    %v1268 = vld [vmem:[#allocation9 + $0x88] sm:$0xf]
    %v1269 = vld [vmem:[#allocation9 + $0x8c] sm:$0xf]
    %v1270 = vld [vmem:[#allocation9 + $0x90] sm:$0xf]
    %v1271 = vld [vmem:[#allocation9 + $0x94] sm:$0xf]
    %v1272 = vld [vmem:[#allocation9 + $0x98] sm:$0xf]
    %v1273 = vld [vmem:[#allocation9 + $0x9c] sm:$0xf]
    %v1274 = vld [vmem:[#allocation9 + $0xa0] sm:$0xf]
    %v1275 = vld [vmem:[#allocation9 + $0xa4] sm:$0xf]
    %v1276 = vld [vmem:[#allocation9 + $0xa8] sm:$0xf]
    %v1277 = vld [vmem:[#allocation9 + $0xac] sm:$0xf]
    %v1278 = vld [vmem:[#allocation9 + $0xb0] sm:$0xf]
    %v1279 = vld [vmem:[#allocation9 + $0xb4] sm:$0xf]
    %v1280 = vld [vmem:[#allocation9 + $0xb8] sm:$0xf]
    %v1281 = vld [vmem:[#allocation9 + $0xbc] sm:$0xf]
    %v1282 = vld [vmem:[#allocation9 + $0xc0] sm:$0xf]
    %v1283 = vld [vmem:[#allocation9 + $0xc4] sm:$0xf]
    %v1284 = vld [vmem:[#allocation9 + $0xc8] sm:$0xf]
    %v1285 = vld [vmem:[#allocation9 + $0xcc] sm:$0xf]
    %v1286 = vld [vmem:[#allocation9 + $0xd0] sm:$0xf]
    %v1287 = vld [vmem:[#allocation9 + $0xd4] sm:$0xf]
    %v1288 = vld [vmem:[#allocation9 + $0xd8] sm:$0xf]
    %v1289 = vld [vmem:[#allocation9 + $0xdc] sm:$0xf]
    %v1290 = vld [vmem:[#allocation9 + $0xe0] sm:$0xf]
    %v1291 = vld [vmem:[#allocation9 + $0xe4] sm:$0xf]
    %v1292 = vld [vmem:[#allocation9 + $0xe8] sm:$0xf]
    %v1293 = vld [vmem:[#allocation9 + $0xec] sm:$0xf]
    %v1294 = vld [vmem:[#allocation9 + $0xf0] sm:$0xf]
    %v1295 = vld [vmem:[#allocation9 + $0xf4] sm:$0xf]
    %v1296 = vld [vmem:[#allocation9 + $0xf8] sm:$0xf]
    %v1297 = vld [vmem:[#allocation9 + $0xfc] sm:$0xf]
    %v1298 = vld [vmem:[#allocation9 + $0x100] sm:$0xf]
    %v1299 = vld [vmem:[#allocation9 + $0x104] sm:$0xf]
    %v1300 = vld [vmem:[#allocation9 + $0x108] sm:$0xf]
    %v1301 = vld [vmem:[#allocation9 + $0x10c] sm:$0xf]
    %v1302 = vld [vmem:[#allocation9 + $0x110] sm:$0xf]
    %v1303 = vld [vmem:[#allocation9 + $0x114] sm:$0xf]
    %v1304 = vld [vmem:[#allocation9 + $0x118] sm:$0xf]
    %v1305 = vld [vmem:[#allocation9 + $0x11c] sm:$0xf]
    %v1306 = vld [vmem:[#allocation9 + $0x120] sm:$0xf]
    %v1307 = vld [vmem:[#allocation9 + $0x124] sm:$0xf]
    %v1308 = vld [vmem:[#allocation9 + $0x128] sm:$0xf]
    %v1309 = vld [vmem:[#allocation9 + $0x12c] sm:$0xf]
    %v1310 = vld [vmem:[#allocation9 + $0x130] sm:$0xf]
    %v1311 = vld [vmem:[#allocation9 + $0x134] sm:$0xf]
    %v1312 = vld [vmem:[#allocation9 + $0x138] sm:$0xf]
    %v1313 = vld [vmem:[#allocation9 + $0x13c] sm:$0xf]
    %v1314 = vld [vmem:[#allocation9 + $0x140] sm:$0xf]
    %v1315 = vld [vmem:[#allocation9 + $0x144] sm:$0xf]
    %v1316 = vld [vmem:[#allocation9 + $0x148] sm:$0xf]
    %v1317 = vld [vmem:[#allocation9 + $0x14c] sm:$0xf]
    %v1318 = vld [vmem:[#allocation9 + $0x150] sm:$0xf]
    %v1319 = vld [vmem:[#allocation9 + $0x154] sm:$0xf]
    %v1320 = vld [vmem:[#allocation9 + $0x158] sm:$0xf]
    %v1321 = vld [vmem:[#allocation9 + $0x15c] sm:$0xf]
    %v1322 = vld [vmem:[#allocation9 + $0x160] sm:$0xf]
    %v1323 = vld [vmem:[#allocation9 + $0x164] sm:$0xf]
    %v1324 = vld [vmem:[#allocation9 + $0x168] sm:$0xf]
    %v1325 = vld [vmem:[#allocation9 + $0x16c] sm:$0xf]
    %v1326 = vld [vmem:[#allocation9 + $0x170] sm:$0xf]
    %v1327 = vld [vmem:[#allocation9 + $0x174] sm:$0xf]
    %v1328 = vld [vmem:[#allocation9 + $0x178] sm:$0xf]
    %v1329 = vld [vmem:[#allocation9 + $0x17c] sm:$0xf]
    %v1330 = vld [vmem:[%s6] sm:$0x1]
    %v1332 = vlaneseq
    %v1333 = vshrl.u32 %v1332, 7
    %v1334 = vsub.s32 0, %v1333
    %v1335 = vrot.slane %v1330, %v1334
    %v1433 = vunpack.c.l.b16 %v1234
    %v1434 = vunpack.c.l.b16 %v1235
    %v1435 = vunpack.c.l.b16 %v1236
    %v1436 = vunpack.c.l.b16 %v1237
    %v1437 = vunpack.c.l.b16 %v1238
    %v1438 = vunpack.c.l.b16 %v1239
    %v1439 = vunpack.c.l.b16 %v1240
    %v1440 = vunpack.c.l.b16 %v1241
    %v1441 = vunpack.c.l.b16 %v1242
    %v1442 = vunpack.c.l.b16 %v1243
    %v1443 = vunpack.c.l.b16 %v1244
    %v1444 = vunpack.c.l.b16 %v1245
    %v1445 = vunpack.c.l.b16 %v1246
    %v1446 = vunpack.c.l.b16 %v1247
    %v1447 = vunpack.c.l.b16 %v1248
    %v1448 = vunpack.c.l.b16 %v1249
    %v1449 = vunpack.c.l.b16 %v1250
    %v1450 = vunpack.c.l.b16 %v1251
    %v1451 = vunpack.c.l.b16 %v1252
    %v1452 = vunpack.c.l.b16 %v1253
    %v1453 = vunpack.c.l.b16 %v1254
    %v1454 = vunpack.c.l.b16 %v1255
    %v1455 = vunpack.c.l.b16 %v1256
    %v1456 = vunpack.c.l.b16 %v1257
    %v1457 = vunpack.c.l.b16 %v1258
    %v1458 = vunpack.c.l.b16 %v1259
    %v1459 = vunpack.c.l.b16 %v1260
    %v1460 = vunpack.c.l.b16 %v1261
    %v1461 = vunpack.c.l.b16 %v1262
    %v1462 = vunpack.c.l.b16 %v1263
    %v1463 = vunpack.c.l.b16 %v1264
    %v1464 = vunpack.c.l.b16 %v1265
    %v1465 = vunpack.c.l.b16 %v1266
    %v1466 = vunpack.c.l.b16 %v1267
    %v1467 = vunpack.c.l.b16 %v1268
    %v1468 = vunpack.c.l.b16 %v1269
    %v1469 = vunpack.c.l.b16 %v1270
    %v1470 = vunpack.c.l.b16 %v1271
    %v1471 = vunpack.c.l.b16 %v1272
    %v1472 = vunpack.c.l.b16 %v1273
    %v1473 = vunpack.c.l.b16 %v1274
    %v1474 = vunpack.c.l.b16 %v1275
    %v1475 = vunpack.c.l.b16 %v1276
    %v1476 = vunpack.c.l.b16 %v1277
    %v1477 = vunpack.c.l.b16 %v1278
    %v1478 = vunpack.c.l.b16 %v1279
    %v1479 = vunpack.c.l.b16 %v1280
    %v1480 = vunpack.c.l.b16 %v1281
    %v1481 = vunpack.c.l.b16 %v1282
    %v1482 = vunpack.c.l.b16 %v1283
    %v1483 = vunpack.c.l.b16 %v1284
    %v1484 = vunpack.c.l.b16 %v1285
    %v1485 = vunpack.c.l.b16 %v1286
    %v1486 = vunpack.c.l.b16 %v1287
    %v1487 = vunpack.c.l.b16 %v1288
    %v1488 = vunpack.c.l.b16 %v1289
    %v1489 = vunpack.c.l.b16 %v1290
    %v1490 = vunpack.c.l.b16 %v1291
    %v1491 = vunpack.c.l.b16 %v1292
    %v1492 = vunpack.c.l.b16 %v1293
    %v1493 = vunpack.c.l.b16 %v1294
    %v1494 = vunpack.c.l.b16 %v1295
    %v1495 = vunpack.c.l.b16 %v1296
    %v1496 = vunpack.c.l.b16 %v1297
    %v1497 = vunpack.c.l.b16 %v1298
    %v1498 = vunpack.c.l.b16 %v1299
    %v1499 = vunpack.c.l.b16 %v1300
    %v1500 = vunpack.c.l.b16 %v1301
    %v1501 = vunpack.c.l.b16 %v1302
    %v1502 = vunpack.c.l.b16 %v1303
    %v1503 = vunpack.c.l.b16 %v1304
    %v1504 = vunpack.c.l.b16 %v1305
    %v1505 = vunpack.c.l.b16 %v1306
    %v1506 = vunpack.c.l.b16 %v1307
    %v1507 = vunpack.c.l.b16 %v1308
    %v1508 = vunpack.c.l.b16 %v1309
    %v1509 = vunpack.c.l.b16 %v1310
    %v1510 = vunpack.c.l.b16 %v1311
    %v1511 = vunpack.c.l.b16 %v1312
    %v1512 = vunpack.c.l.b16 %v1313
    %v1513 = vunpack.c.l.b16 %v1314
    %v1514 = vunpack.c.l.b16 %v1315
    %v1515 = vunpack.c.l.b16 %v1316
    %v1516 = vunpack.c.l.b16 %v1317
    %v1517 = vunpack.c.l.b16 %v1318
    %v1518 = vunpack.c.l.b16 %v1319
    %v1519 = vunpack.c.l.b16 %v1320
    %v1520 = vunpack.c.l.b16 %v1321
    %v1521 = vunpack.c.l.b16 %v1322
    %v1522 = vunpack.c.l.b16 %v1323
    %v1523 = vunpack.c.l.b16 %v1324
    %v1524 = vunpack.c.l.b16 %v1325
    %v1525 = vunpack.c.l.b16 %v1326
    %v1526 = vunpack.c.l.b16 %v1327
    %v1527 = vunpack.c.l.b16 %v1328
    %v1528 = vunpack.c.l.b16 %v1329
    %v1529 = vpack.c.b16 %v1434, %v1433
    %v1530 = vpack.c.b16 %v1436, %v1435
    %v1531 = vpack.c.b16 %v1438, %v1437
    %v1532 = vpack.c.b16 %v1440, %v1439
    %v1533 = vpack.c.b16 %v1442, %v1441
    %v1534 = vpack.c.b16 %v1444, %v1443
    %v1535 = vpack.c.b16 %v1446, %v1445
    %v1536 = vpack.c.b16 %v1448, %v1447
    %v1537 = vpack.c.b16 %v1450, %v1449
    %v1538 = vpack.c.b16 %v1452, %v1451
    %v1539 = vpack.c.b16 %v1454, %v1453
    %v1540 = vpack.c.b16 %v1456, %v1455
    %v1541 = vpack.c.b16 %v1458, %v1457
    %v1542 = vpack.c.b16 %v1460, %v1459
    %v1543 = vpack.c.b16 %v1462, %v1461
    %v1544 = vpack.c.b16 %v1464, %v1463
    %v1545 = vpack.c.b16 %v1466, %v1465
    %v1546 = vpack.c.b16 %v1468, %v1467
    %v1547 = vpack.c.b16 %v1470, %v1469
    %v1548 = vpack.c.b16 %v1472, %v1471
    %v1549 = vpack.c.b16 %v1474, %v1473
    %v1550 = vpack.c.b16 %v1476, %v1475
    %v1551 = vpack.c.b16 %v1478, %v1477
    %v1552 = vpack.c.b16 %v1480, %v1479
    %v1553 = vpack.c.b16 %v1482, %v1481
    %v1554 = vpack.c.b16 %v1484, %v1483
    %v1555 = vpack.c.b16 %v1486, %v1485
    %v1556 = vpack.c.b16 %v1488, %v1487
    %v1557 = vpack.c.b16 %v1490, %v1489
    %v1558 = vpack.c.b16 %v1492, %v1491
    %v1559 = vpack.c.b16 %v1494, %v1493
    %v1560 = vpack.c.b16 %v1496, %v1495
    %v1561 = vpack.c.b16 %v1498, %v1497
    %v1562 = vpack.c.b16 %v1500, %v1499
    %v1563 = vpack.c.b16 %v1502, %v1501
    %v1564 = vpack.c.b16 %v1504, %v1503
    %v1565 = vpack.c.b16 %v1506, %v1505
    %v1566 = vpack.c.b16 %v1508, %v1507
    %v1567 = vpack.c.b16 %v1510, %v1509
    %v1568 = vpack.c.b16 %v1512, %v1511
    %v1569 = vpack.c.b16 %v1514, %v1513
    %v1570 = vpack.c.b16 %v1516, %v1515
    %v1571 = vpack.c.b16 %v1518, %v1517
    %v1572 = vpack.c.b16 %v1520, %v1519
    %v1573 = vpack.c.b16 %v1522, %v1521
    %v1574 = vpack.c.b16 %v1524, %v1523
    %v1575 = vpack.c.b16 %v1526, %v1525
    %v1576 = vpack.c.b16 %v1528, %v1527
    %1625 = vmatprep.subr.bf16.mxu0 0
    %1626 = vmatpush1.bf16.msra.mxu0 %v1536
    %1627 = vmatprep.subr.bf16.mxu0 0
    %1628 = vmatpush1.bf16.msra.mxu0 %v1535
    %1629 = vmatprep.subr.bf16.mxu0 0
    %1630 = vmatpush1.bf16.msra.mxu0 %v1534
    %1631 = vmatprep.subr.bf16.mxu0 0
    %1632 = vmatpush1.bf16.msra.mxu0 %v1533
    %1633 = vmatprep.subr.bf16.mxu0 0
    %1634 = vmatpush1.bf16.msra.mxu0 %v1532
    %1635 = vmatprep.subr.bf16.mxu0 0
    %1636 = vmatpush1.bf16.msra.mxu0 %v1531
    %1637 = vmatprep.subr.bf16.mxu0 0
    %1638 = vmatpush1.bf16.msra.mxu0 %v1530
    %1639 = vmatprep.subr.bf16.mxu0 0
    %1640 = vmatpush1.bf16.msra.mxu0 %v1529
    %1641 = vmatprep.subr.bf16.mxu0 0
    %1642 = vmatpush2.bf16.msra.mxu0 %v1544
    %1643 = vmatprep.subr.bf16.mxu0 0
    %1644 = vmatpush2.bf16.msra.mxu0 %v1543
    %1645 = vmatprep.subr.bf16.mxu0 0
    %1646 = vmatpush2.bf16.msra.mxu0 %v1542
    %1647 = vmatprep.subr.bf16.mxu0 0
    %1648 = vmatpush2.bf16.msra.mxu0 %v1541
    %1649 = vmatprep.subr.bf16.mxu0 0
    %1650 = vmatpush2.bf16.msra.mxu0 %v1540
    %1651 = vmatprep.subr.bf16.mxu0 0
    %1652 = vmatpush2.bf16.msra.mxu0 %v1539
    %1653 = vmatprep.subr.bf16.mxu0 0
    %1654 = vmatpush2.bf16.msra.mxu0 %v1538
    %1655 = vmatprep.subr.bf16.mxu0 0
    %1656 = vmatpush2.bf16.msra.mxu0 %v1537
    %1657 = vmatprep.mubr.bf16.mxu0 %v1229
    %1658 = vmatmul.mubr.bf16.gmra.mxu0 %v1228
    %v1659 = vpop.f32.mrf.mxu0
    %v1660 = vadd.f32 %v1335, %v1659
    %v1661 = vpop.f32.mrf.mxu0
    %v1662 = vpop.f32.mrf.mxu0
    %v1663 = vpop.f32.mrf.mxu0
    %1664 = vdwg.mxu0
    %1665 = vmatprep.subr.bf16.mxu0 0
    %1666 = vmatpush1.bf16.msra.mxu0 %v1552
    %1667 = vmatprep.subr.bf16.mxu0 0
    %1668 = vmatpush1.bf16.msra.mxu0 %v1551
    %1669 = vmatprep.subr.bf16.mxu0 0
    %1670 = vmatpush1.bf16.msra.mxu0 %v1550
    %1671 = vmatprep.subr.bf16.mxu0 0
    %1672 = vmatpush1.bf16.msra.mxu0 %v1549
    %1673 = vmatprep.subr.bf16.mxu0 0
    %1674 = vmatpush1.bf16.msra.mxu0 %v1548
    %1675 = vmatprep.subr.bf16.mxu0 0
    %1676 = vmatpush1.bf16.msra.mxu0 %v1547
    %1677 = vmatprep.subr.bf16.mxu0 0
    %1678 = vmatpush1.bf16.msra.mxu0 %v1546
    %1679 = vmatprep.subr.bf16.mxu0 0
    %1680 = vmatpush1.bf16.msra.mxu0 %v1545
    %1681 = vmatprep.subr.bf16.mxu0 0
    %1682 = vmatpush2.bf16.msra.mxu0 %v1560
    %1683 = vmatprep.subr.bf16.mxu0 0
    %1684 = vmatpush2.bf16.msra.mxu0 %v1559
    %1685 = vmatprep.subr.bf16.mxu0 0
    %1686 = vmatpush2.bf16.msra.mxu0 %v1558
    %1687 = vmatprep.subr.bf16.mxu0 0
    %1688 = vmatpush2.bf16.msra.mxu0 %v1557
    %1689 = vmatprep.subr.bf16.mxu0 0
    %1690 = vmatpush2.bf16.msra.mxu0 %v1556
    %1691 = vmatprep.subr.bf16.mxu0 0
    %1692 = vmatpush2.bf16.msra.mxu0 %v1555
    %1693 = vmatprep.subr.bf16.mxu0 0
    %1694 = vmatpush2.bf16.msra.mxu0 %v1554
    %1695 = vmatprep.subr.bf16.mxu0 0
    %1696 = vmatpush2.bf16.msra.mxu0 %v1553
    %1697 = vmatprep.mubr.bf16.mxu0 %v1231
    %1698 = vmatmul.mubr.bf16.gmra.mxu0 %v1230
    %v1699 = vpop.f32.mrf.mxu0
    %v1700 = vadd.f32 %v1660, %v1699
    %v1701 = vpop.f32.mrf.mxu0
    %v1702 = vpop.f32.mrf.mxu0
    %v1703 = vpop.f32.mrf.mxu0
    %1704 = vdwg.mxu0
    %1705 = vmatprep.subr.bf16.mxu0 0
    %1706 = vmatpush1.bf16.msra.mxu0 %v1568
    %1707 = vmatprep.subr.bf16.mxu0 0
    %1708 = vmatpush1.bf16.msra.mxu0 %v1567
    %1709 = vmatprep.subr.bf16.mxu0 0
    %1710 = vmatpush1.bf16.msra.mxu0 %v1566
    %1711 = vmatprep.subr.bf16.mxu0 0
    %1712 = vmatpush1.bf16.msra.mxu0 %v1565
    %1713 = vmatprep.subr.bf16.mxu0 0
    %1714 = vmatpush1.bf16.msra.mxu0 %v1564
    %1715 = vmatprep.subr.bf16.mxu0 0
    %1716 = vmatpush1.bf16.msra.mxu0 %v1563
    %1717 = vmatprep.subr.bf16.mxu0 0
    %1718 = vmatpush1.bf16.msra.mxu0 %v1562
    %1719 = vmatprep.subr.bf16.mxu0 0
    %1720 = vmatpush1.bf16.msra.mxu0 %v1561
    %1721 = vmatprep.subr.bf16.mxu0 0
    %1722 = vmatpush2.bf16.msra.mxu0 %v1576
    %1723 = vmatprep.subr.bf16.mxu0 0
    %1724 = vmatpush2.bf16.msra.mxu0 %v1575
    %1725 = vmatprep.subr.bf16.mxu0 0
    %1726 = vmatpush2.bf16.msra.mxu0 %v1574
    %1727 = vmatprep.subr.bf16.mxu0 0
    %1728 = vmatpush2.bf16.msra.mxu0 %v1573
    %1729 = vmatprep.subr.bf16.mxu0 0
    %1730 = vmatpush2.bf16.msra.mxu0 %v1572
    %1731 = vmatprep.subr.bf16.mxu0 0
    %1732 = vmatpush2.bf16.msra.mxu0 %v1571
    %1733 = vmatprep.subr.bf16.mxu0 0
    %1734 = vmatpush2.bf16.msra.mxu0 %v1570
    %1735 = vmatprep.subr.bf16.mxu0 0
    %1736 = vmatpush2.bf16.msra.mxu0 %v1569
    %1737 = vmatprep.mubr.bf16.mxu0 %v1233
    %1738 = vmatmul.mubr.bf16.gmra.mxu0 %v1232
    %v1739 = vpop.f32.mrf.mxu0
    %v1740 = vadd.f32 %v1700, %v1739
    %v1741 = vpop.f32.mrf.mxu0
    %v1742 = vpop.f32.mrf.mxu0
    %v1743 = vpop.f32.mrf.mxu0
    %1744 = vdwg.mxu0
    %v1745 = vmax.f32 %v1740, 0.0
    %v1746 = vpack.c.bf16 %v1745, %v1745
    %v1747 = vld [vmem:[%s7] sm:$0xf]
    %v1748 = vld [vmem:[%s7 + $0x4] sm:$0xf]
    %v1749 = vld [vmem:[%s7 + $0x8] sm:$0xf]
    %v1750 = vld [vmem:[%s7 + $0xc] sm:$0xf]
    %v1751 = vld [vmem:[%s7 + $0x10] sm:$0xf]
    %v1752 = vld [vmem:[%s7 + $0x14] sm:$0xf]
    %v1753 = vld [vmem:[%s7 + $0x18] sm:$0xf]
    %v1754 = vld [vmem:[%s7 + $0x1c] sm:$0xf]
    %v1755 = vld [vmem:[%s7 + $0x20] sm:$0xf]
    %v1756 = vld [vmem:[%s7 + $0x24] sm:$0xf]
    %v1757 = vld [vmem:[%s7 + $0x28] sm:$0xf]
    %v1758 = vld [vmem:[%s7 + $0x2c] sm:$0xf]
    %v1759 = vld [vmem:[%s7 + $0x30] sm:$0xf]
    %v1760 = vld [vmem:[%s7 + $0x34] sm:$0xf]
    %v1761 = vld [vmem:[%s7 + $0x38] sm:$0xf]
    %v1762 = vld [vmem:[%s7 + $0x3c] sm:$0xf]
    %v1763 = vld [vmem:[%s8] sm:$0x1]
    %v1765 = vlaneseq
    %v1766 = vshrl.u32 %v1765, 7
    %v1767 = vsub.s32 0, %v1766
    %v1768 = vrot.slane %v1763, %v1767
    %v1786 = vunpack.c.l.b16 %v1747
    %v1787 = vunpack.c.l.b16 %v1748
    %v1788 = vunpack.c.l.b16 %v1749
    %v1789 = vunpack.c.l.b16 %v1750
    %v1790 = vunpack.c.l.b16 %v1751
    %v1791 = vunpack.c.l.b16 %v1752
    %v1792 = vunpack.c.l.b16 %v1753
    %v1793 = vunpack.c.l.b16 %v1754
    %v1794 = vunpack.c.l.b16 %v1755
    %v1795 = vunpack.c.l.b16 %v1756
    %v1796 = vunpack.c.l.b16 %v1757
    %v1797 = vunpack.c.l.b16 %v1758
    %v1798 = vunpack.c.l.b16 %v1759
    %v1799 = vunpack.c.l.b16 %v1760
    %v1800 = vunpack.c.l.b16 %v1761
    %v1801 = vunpack.c.l.b16 %v1762
    %v1802 = vpack.c.b16 %v1787, %v1786
    %v1803 = vpack.c.b16 %v1789, %v1788
    %v1804 = vpack.c.b16 %v1791, %v1790
    %v1805 = vpack.c.b16 %v1793, %v1792
    %v1806 = vpack.c.b16 %v1795, %v1794
    %v1807 = vpack.c.b16 %v1797, %v1796
    %v1808 = vpack.c.b16 %v1799, %v1798
    %v1809 = vpack.c.b16 %v1801, %v1800
    %1818 = vmatprep.subr.bf16.mxu0 0
    %1819 = vmatpush1.bf16.msra.mxu0 %v1809
    %1820 = vmatprep.subr.bf16.mxu0 0
    %1821 = vmatpush1.bf16.msra.mxu0 %v1808
    %1822 = vmatprep.subr.bf16.mxu0 0
    %1823 = vmatpush1.bf16.msra.mxu0 %v1807
    %1824 = vmatprep.subr.bf16.mxu0 0
    %1825 = vmatpush1.bf16.msra.mxu0 %v1806
    %1826 = vmatprep.subr.bf16.mxu0 0
    %1827 = vmatpush1.bf16.msra.mxu0 %v1805
    %1828 = vmatprep.subr.bf16.mxu0 0
    %1829 = vmatpush1.bf16.msra.mxu0 %v1804
    %1830 = vmatprep.subr.bf16.mxu0 0
    %1831 = vmatpush1.bf16.msra.mxu0 %v1803
    %1832 = vmatprep.subr.bf16.mxu0 0
    %1833 = vmatpush1.bf16.msra.mxu0 %v1802
    %1834 = vmatprep.subr.bf16.mxu0 0
    %1835 = vmatpush2.bf16.msra.mxu0 0
    %1836 = vmatprep.subr.bf16.mxu0 0
    %1837 = vmatpush2.bf16.msra.mxu0 0
    %1838 = vmatprep.subr.bf16.mxu0 0
    %1839 = vmatpush2.bf16.msra.mxu0 0
    %1840 = vmatprep.subr.bf16.mxu0 0
    %1841 = vmatpush2.bf16.msra.mxu0 0
    %1842 = vmatprep.subr.bf16.mxu0 0
    %1843 = vmatpush2.bf16.msra.mxu0 0
    %1844 = vmatprep.subr.bf16.mxu0 0
    %1845 = vmatpush2.bf16.msra.mxu0 0
    %1846 = vmatprep.subr.bf16.mxu0 0
    %1847 = vmatpush2.bf16.msra.mxu0 0
    %1848 = vmatprep.subr.bf16.mxu0 0
    %1849 = vmatpush2.bf16.msra.mxu0 0
    %1850 = vmatprep.mubr.bf16.mxu0 0
    %1851 = vmatmul.mubr.bf16.gmra.mxu0 %v1746
    %v1852 = vpop.f32.mrf.mxu0
    %v1853 = vadd.f32 %v1768, %v1852
    %v1854 = vpop.f32.mrf.mxu0
    %v1855 = vpop.f32.mrf.mxu0
    %v1856 = vpop.f32.mrf.mxu0
    %1857 = vdwg.mxu0
    %v1858 = vmax.f32 %v1853, 0.0
    %v1859 = vpack.c.bf16 %v1858, %v1858
    %v1860 = vld [vmem:[#allocation11] sm:$0xf]
    %v1861 = vld [vmem:[#allocation11 + $0x4] sm:$0xf]
    %v1862 = vld [vmem:[#allocation11 + $0x8] sm:$0xf]
    %v1863 = vld [vmem:[#allocation11 + $0xc] sm:$0xf]
    %v1864 = vld [vmem:[#allocation11 + $0x10] sm:$0xf]
    %v1865 = vld [vmem:[#allocation11 + $0x14] sm:$0xf]
    %v1866 = vld [vmem:[#allocation11 + $0x18] sm:$0xf]
    %v1867 = vld [vmem:[#allocation11 + $0x1c] sm:$0xf]
    %v1868 = vld [vmem:[#allocation11 + $0x20] sm:$0xf]
    %v1869 = vld [vmem:[#allocation11 + $0x24] sm:$0xf]
    %v1870 = vld [vmem:[#allocation11 + $0x28] sm:$0xf]
    %v1871 = vld [vmem:[#allocation11 + $0x2c] sm:$0xf]
    %v1872 = vld [vmem:[#allocation11 + $0x30] sm:$0xf]
    %v1873 = vld [vmem:[#allocation11 + $0x34] sm:$0xf]
    %v1874 = vld [vmem:[#allocation11 + $0x38] sm:$0xf]
    %v1875 = vld [vmem:[#allocation11 + $0x3c] sm:$0xf]
    %v1876 = vld [vmem:[%s10] sm:$0x1]
    %v1878 = vlaneseq
    %v1879 = vshrl.u32 %v1878, 7
    %v1880 = vsub.s32 0, %v1879
    %v1881 = vrot.slane %v1876, %v1880
    %v1899 = vunpack.c.l.b16 %v1860
    %v1900 = vunpack.c.l.b16 %v1861
    %v1901 = vunpack.c.l.b16 %v1862
    %v1902 = vunpack.c.l.b16 %v1863
    %v1903 = vunpack.c.l.b16 %v1864
    %v1904 = vunpack.c.l.b16 %v1865
    %v1905 = vunpack.c.l.b16 %v1866
    %v1906 = vunpack.c.l.b16 %v1867
    %v1907 = vunpack.c.l.b16 %v1868
    %v1908 = vunpack.c.l.b16 %v1869
    %v1909 = vunpack.c.l.b16 %v1870
    %v1910 = vunpack.c.l.b16 %v1871
    %v1911 = vunpack.c.l.b16 %v1872
    %v1912 = vunpack.c.l.b16 %v1873
    %v1913 = vunpack.c.l.b16 %v1874
    %v1914 = vunpack.c.l.b16 %v1875
    %v1915 = vpack.c.b16 %v1900, %v1899
    %v1916 = vpack.c.b16 %v1902, %v1901
    %v1917 = vpack.c.b16 %v1904, %v1903
    %v1918 = vpack.c.b16 %v1906, %v1905
    %v1919 = vpack.c.b16 %v1908, %v1907
    %v1920 = vpack.c.b16 %v1910, %v1909
    %v1921 = vpack.c.b16 %v1912, %v1911
    %v1922 = vpack.c.b16 %v1914, %v1913
    %1931 = vmatprep.subr.bf16.mxu0 0
    %1932 = vmatpush1.bf16.msra.mxu0 %v1922
    %1933 = vmatprep.subr.bf16.mxu0 0
    %1934 = vmatpush1.bf16.msra.mxu0 %v1921
    %1935 = vmatprep.subr.bf16.mxu0 0
    %1936 = vmatpush1.bf16.msra.mxu0 %v1920
    %1937 = vmatprep.subr.bf16.mxu0 0
    %1938 = vmatpush1.bf16.msra.mxu0 %v1919
    %1939 = vmatprep.subr.bf16.mxu0 0
    %1940 = vmatpush1.bf16.msra.mxu0 %v1918
    %1941 = vmatprep.subr.bf16.mxu0 0
    %1942 = vmatpush1.bf16.msra.mxu0 %v1917
    %1943 = vmatprep.subr.bf16.mxu0 0
    %1944 = vmatpush1.bf16.msra.mxu0 %v1916
    %1945 = vmatprep.subr.bf16.mxu0 0
    %1946 = vmatpush1.bf16.msra.mxu0 %v1915
    %1947 = vmatprep.subr.bf16.mxu0 0
    %1948 = vmatpush2.bf16.msra.mxu0 0
    %1949 = vmatprep.subr.bf16.mxu0 0
    %1950 = vmatpush2.bf16.msra.mxu0 0
    %1951 = vmatprep.subr.bf16.mxu0 0
    %1952 = vmatpush2.bf16.msra.mxu0 0
    %1953 = vmatprep.subr.bf16.mxu0 0
    %1954 = vmatpush2.bf16.msra.mxu0 0
    %1955 = vmatprep.subr.bf16.mxu0 0
    %1956 = vmatpush2.bf16.msra.mxu0 0
    %1957 = vmatprep.subr.bf16.mxu0 0
    %1958 = vmatpush2.bf16.msra.mxu0 0
    %1959 = vmatprep.subr.bf16.mxu0 0
    %1960 = vmatpush2.bf16.msra.mxu0 0
    %1961 = vmatprep.subr.bf16.mxu0 0
    %1962 = vmatpush2.bf16.msra.mxu0 0
    %1963 = vmatprep.mubr.bf16.mxu0 0
    %1964 = vmatmul.mubr.bf16.gmra.mxu0 %v1859
    %v1965 = vpop.f32.mrf.mxu0
    %v1966 = vadd.f32 %v1881, %v1965
    %v1967 = vpop.f32.mrf.mxu0
    %v1968 = vpop.f32.mrf.mxu0
    %v1969 = vpop.f32.mrf.mxu0
    %1970 = vdwg.mxu0
    %1971 = vst [vmem:[#allocation12] sm:$0x3] %v1966
    // Predicated region
    $region58: #{net_forward_pallas.1} parent=1 // pred_check
      _
    $region59: #{net_forward_pallas.1} parent=1 // pred_check_branch
      %1973 = sbr.rel (0) target = $region61
    $region60: #{net_forward_pallas.1} parent=1 // pred_region
      %s1975 = ssub.s32 32, 32
      %1976 = vsyncadd [#allocation8], %s1975
      %s1978 = sshll.u32 [#allocation12], 4
      %s1979 = int_to_ptr.vmem [resolvable:$true] %s1978
      %1981 = dma.vmem_to_hbm [thread:$0]  %s1979, 32, %s11, [#allocation8]
    $region61: #{net_forward_pallas.1} parent=1 // pred_fallthru
      _
    // Predicated region
    $region62: #{net_forward_pallas.1} parent=1 // pred_check
      _
    $region63: #{net_forward_pallas.1} parent=1 // pred_check_branch
      %1983 = sbr.rel (0) target = $region65
    $region64: #{net_forward_pallas.1} parent=1 // pred_region
      %1984 = dma.done [#allocation8], 32
    $region65: #{net_forward_pallas.1} parent=1 // pred_fallthru
      _
    %1985 = vsyncpa [#allocation7], 1
    %1986 = vsyncpa [#allocation10], 1
    %1987 = vsyncpa [#allocation8], 1

</llo_original>
